<compile_context>
chip_gen: v6e
topology: v6e:2x2x1
jax: 0.10.0
libtpu: 0.0.40
codegen_flags: <defaults>
</compile_context>

<pallas_src>
import jax
import jax.numpy as jnp
from jax.experimental import pallas as pl
from jax.experimental.pallas import tpu as pltpu


def pos_embed_kernel(x_ref, w1s_ref, w2_ref, shift_ref, b2_ref, o_ref):
    # x_ref:     (1, C_in, T)   input positions tile (T on lanes), f32
    # w1s_ref:   (F, C_in)      conv1 weight with BN scale folded in, f32
    # w2_ref:    (F, F)         conv2 weight, bf16 (MXU-native)
    # shift_ref: (F, 1)         BN shift (beta - scale * mean), f32
    # b2_ref:    (F, 1)         conv2 bias, f32
    # o_ref:     (1, F, T)      output tile (PyTorch (B, F, N) layout), f32
    x = x_ref[0]                                  # (C_in, T)
    cin = x.shape[0]

    # conv1 (K = C_in = 3) as broadcast FMAs on the VPU, BN scale folded in.
    # Start from the first term and add the BN shift once via implicit
    # broadcasting (no materialized (F, T) broadcast temporary).
    h = w1s_ref[:, 0:1] * x[0:1, :]
    for c in range(1, cin):                       # tiny static unroll (C_in = 3)
        h = h + w1s_ref[:, c:c + 1] * x[c:c + 1, :]
    h = h + shift_ref[...]

    # ReLU, then feed the MXU bf16 operands (f32 accumulation).
    a = jnp.maximum(h, 0.0).astype(jnp.bfloat16)

    # conv2: (F, F) @ (F, T) on the MXU.
    out = jnp.dot(w2_ref[...], a, preferred_element_type=jnp.float32) + b2_ref[...]
    o_ref[0] = out.astype(o_ref.dtype)


def _choose_tile_n(n_pad, batch, target=2048):
    """n_pad is a multiple of 128.  Pick the largest 128-multiple divisor of
    n_pad that is <= target (2048: amortizes per-step cost on v5e/v6e while
    fitting v7x's 64 MiB VMEM with double-buffering).  If the whole grid would
    be a single program (B==1, small N), split further so v7x's two
    TensorCores both get work."""
    def best(limit):
        t = max(128, min(n_pad, (limit // 128) * 128))
        while n_pad % t:
            t -= 128
        return t

    tile = best(target)
    if batch * (n_pad // tile) < 2 and n_pad >= 256:
        tile = best(n_pad // 2)
    return tile


def _invariant_spec(block_shape):
    """BlockSpec for a grid-invariant operand; single-buffered when the
    running JAX version supports pipeline_mode=pl.Buffered(1)."""
    index_map = lambda b, n: (0,) * len(block_shape)
    if hasattr(pl, "Buffered"):
        try:
            return pl.BlockSpec(block_shape, index_map,
                                pipeline_mode=pl.Buffered(1))
        except TypeError:
            pass
    return pl.BlockSpec(block_shape, index_map)


def position_embedding_learned(xyz, params, eps=1e-5):
    """xyz: (B, N, C_in) float32 -> (B, F, N) float32 (PyTorch output layout)."""
    B, N, C_in = xyz.shape
    F = params["w2"].shape[0]
    M = B * N

    xyz = xyz.astype(jnp.float32)
    w1 = params["w1"].reshape(F, C_in).astype(jnp.float32)
    w2 = params["w2"].reshape(F, F).astype(jnp.float32)
    b2 = params["b2"].reshape(F, 1).astype(jnp.float32)
    gamma = params["gamma"].reshape(F).astype(jnp.float32)
    beta = params["beta"].reshape(F).astype(jnp.float32)

    # ---- tiny XLA pre-pass (f32): exact training-mode BN batch stats --------
    # h = W1 x (+ b1) per position; over the B*N positions:
    #   mean_f(h) = w1_f . mean(x) (+ b1_f)   (b1 cancels in normalization)
    #   var_f(h)  = w1_f^T Cov(x) w1_f        (biased covariance, as PyTorch)
    x2 = xyz.reshape(M, C_in)
    mean_x = jnp.mean(x2, axis=0)                                  # (C,)
    xc = x2 - mean_x
    cov_x = (xc.T @ xc) / M                                        # (C, C)
    mean_h = w1 @ mean_x                                           # (F,)
    var_h = jnp.einsum("fc,cd,fd->f", w1, cov_x, w1)               # (F,)
    var_h = jnp.maximum(var_h, 0.0)                                # guard f32 round-off
    scale = gamma * jax.lax.rsqrt(var_h + eps)                     # (F,)
    w1s = w1 * scale[:, None]                                      # fold BN scale into conv1
    shift = (beta - scale * mean_h).reshape(F, 1)                  # BN shift

    # conv2 weight goes to the MXU as bf16 (f32 accumulation in-kernel).
    w2_bf16 = w2.astype(jnp.bfloat16)

    # Input in the module's own NCL layout (tiny transpose: only 3 channels),
    # padded on the position axis to a multiple of 128 (lane-dense tiles,
    # unmasked stores; padded columns are sliced off afterwards).
    x_bcn = jnp.transpose(xyz, (0, 2, 1))                          # (B, C_in, N)
    n_pad = int(pl.cdiv(N, 128)) * 128
    if n_pad != N:
        x_bcn = jnp.pad(x_bcn, ((0, 0), (0, 0), (0, n_pad - N)))

    TILE_N = _choose_tile_n(n_pad, B)
    grid = (B, n_pad // TILE_N)

    flops = 2 * B * n_pad * F * (C_in + F)
    bytes_accessed = (4 * B * C_in * n_pad + 4 * B * F * n_pad
                      + 4 * F * C_in + 2 * F * F + 4 * 2 * F)

    out = pl.pallas_call(
        pos_embed_kernel,
        out_shape=jax.ShapeDtypeStruct((B, F, n_pad), jnp.float32),
        grid=grid,
        in_specs=[
            pl.BlockSpec((1, C_in, TILE_N), lambda b, n: (b, 0, n)),   # x tile
            _invariant_spec((F, C_in)),                                # w1 (BN-scaled)
            _invariant_spec((F, F)),                                   # w2 (bf16)
            _invariant_spec((F, 1)),                                   # BN shift
            _invariant_spec((F, 1)),                                   # b2
        ],
        out_specs=pl.BlockSpec((1, F, TILE_N), lambda b, n: (b, 0, n)),
        compiler_params=pltpu.CompilerParams(
            dimension_semantics=("parallel", "parallel"),
            vmem_limit_bytes=48 * 1024 * 1024,
        ),
        cost_estimate=pl.CostEstimate(
            flops=flops, transcendentals=0, bytes_accessed=bytes_accessed),
    )(x_bcn, w1s, w2_bf16, shift, b2)

    if n_pad != N:
        out = out[:, :, :N]
    return out


def init_params(key, input_channel, num_pos_feats):
    k1, k2, k3, k4 = jax.random.split(key, 4)
    # Deterministic synthetic init (no checkpoint load).
    w1 = jax.random.normal(k1, (num_pos_feats, input_channel, 1), jnp.float32) * 0.1
    b1 = jax.random.normal(k2, (num_pos_feats,), jnp.float32) * 0.1
    w2 = jax.random.normal(k3, (num_pos_feats, num_pos_feats, 1), jnp.float32) * 0.1
    b2 = jax.random.normal(k4, (num_pos_feats,), jnp.float32) * 0.1
    gamma = jnp.ones((num_pos_feats,), jnp.float32)   # BatchNorm1d default init
    beta = jnp.zeros((num_pos_feats,), jnp.float32)
    return dict(w1=w1, b1=b1, w2=w2, b2=b2, gamma=gamma, beta=beta)


def reference(xyz, params, eps=1e-5):
    """Pure-XLA f32 reference matching the PyTorch module in train mode."""
    B, N, C = xyz.shape
    F = params["w2"].shape[0]
    x = jnp.transpose(xyz, (0, 2, 1)).astype(jnp.float32)            # (B, C, N)
    w1 = params["w1"].reshape(F, C)
    b1 = params["b1"].reshape(F)
    h = jnp.einsum("fc,bcn->bfn", w1, x) + b1[None, :, None]
    mean = jnp.mean(h, axis=(0, 2), keepdims=True)
    var = jnp.mean((h - mean) ** 2, axis=(0, 2), keepdims=True)
    h = (h - mean) * jax.lax.rsqrt(var + eps)
    h = h * params["gamma"].reshape(1, F, 1) + params["beta"].reshape(1, F, 1)
    h = jnp.maximum(h, 0.0)
    w2 = params["w2"].reshape(F, F)
    b2 = params["b2"].reshape(F)
    return jnp.einsum("gf,bfn->bgn", w2, h) + b2[None, :, None]


if __name__ == "__main__":
    # Shapes consistent with the module: PositionEmbeddingLearned(3, 288).
    C_IN, NUM_POS_FEATS = 3, 288

    key = jax.random.PRNGKey(0)
    kx, kp, kx2 = jax.random.split(key, 3)
    params = init_params(kp, C_IN, NUM_POS_FEATS)
    fn = jax.jit(position_embedding_learned)

    # Main case: B=2, N=128 (128-aligned).
    B, N = 2, 128
    xyz = jax.random.normal(kx, (B, N, C_IN), jnp.float32)
    out = jax.block_until_ready(fn(xyz, params))
    assert out.shape == (B, NUM_POS_FEATS, N), out.shape
    err = float(jnp.max(jnp.abs(out - reference(xyz, params))))
    assert err < 3e-2, f"max abs error vs reference: {err}"

    # Non-128-aligned case (exercises the pad/slice path and B==1 grid split).
    B2, N2 = 1, 200
    xyz2 = jax.random.normal(kx2, (B2, N2, C_IN), jnp.float32)
    out2 = jax.block_until_ready(fn(xyz2, params))
    assert out2.shape == (B2, NUM_POS_FEATS, N2), out2.shape
    err2 = float(jnp.max(jnp.abs(out2 - reference(xyz2, params))))
    assert err2 < 3e-2, f"max abs error vs reference (padded case): {err2}"

    print("KERNEL_OK")
</pallas_src>

<mosaic_0001>
module attributes {stable_mosaic.version = 11 : i64} {
  func.func @pos_embed_kernel(%arg0: i32, %arg1: i32, %arg2: memref<1x3x128xf32, #tpu.memory_space<vmem>>, %arg3: memref<288x3xf32, #tpu.memory_space<vmem>>, %arg4: memref<288x288xbf16, #tpu.memory_space<vmem>>, %arg5: memref<288x1xf32, #tpu.memory_space<vmem>>, %arg6: memref<288x1xf32, #tpu.memory_space<vmem>>, %arg7: memref<1x288x128xf32, #tpu.memory_space<vmem>>) attributes {dimension_semantics = [#tpu.dimension_semantics<parallel>, #tpu.dimension_semantics<parallel>], iteration_bounds = array<i64: 2, 1>, scalar_prefetch = 0 : i64, scratch_operands = 0 : i64, tpu.core_type = #tpu.core_type<tc>, window_params = [{transform_indices = @transform_0, window_bounds = array<i64: 1, 3, 128>}, {pipeline_mode = #tpu.pipeline_mode<synchronous>, transform_indices = @transform_1, window_bounds = array<i64: 288, 3>}, {pipeline_mode = #tpu.pipeline_mode<synchronous>, transform_indices = @transform_2, window_bounds = array<i64: 288, 288>}, {pipeline_mode = #tpu.pipeline_mode<synchronous>, transform_indices = @transform_3, window_bounds = array<i64: 288, 1>}, {pipeline_mode = #tpu.pipeline_mode<synchronous>, transform_indices = @transform_4, window_bounds = array<i64: 288, 1>}, {transform_indices = @transform_5, window_bounds = array<i64: 1, 288, 128>}]} {
    %c0 = arith.constant 0 : index
    %c0_0 = arith.constant 0 : index
    %c0_1 = arith.constant 0 : index
    %0 = vector.load %arg2[%c0, %c0_0, %c0_1] : memref<1x3x128xf32, #tpu.memory_space<vmem>>, vector<1x3x128xf32>
    %1 = vector.shape_cast %0 : vector<1x3x128xf32> to vector<3x128xf32>
    %c0_2 = arith.constant 0 : index
    %c0_3 = arith.constant 0 : index
    %2 = vector.load %arg3[%c0_2, %c0_3] : memref<288x3xf32, #tpu.memory_space<vmem>>, vector<288x1xf32>
    %3 = vector.extract_strided_slice %1 {offsets = [0, 0], sizes = [1, 128], strides = [1, 1]} : vector<3x128xf32> to vector<1x128xf32>
    %4 = vector.broadcast %2 : vector<288x1xf32> to vector<288x128xf32>
    %5 = vector.broadcast %3 : vector<1x128xf32> to vector<288x128xf32>
    %6 = arith.mulf %4, %5 : vector<288x128xf32>
    %c0_4 = arith.constant 0 : index
    %c1 = arith.constant 1 : index
    %7 = vector.load %arg3[%c0_4, %c1] : memref<288x3xf32, #tpu.memory_space<vmem>>, vector<288x1xf32>
    %8 = vector.extract_strided_slice %1 {offsets = [1, 0], sizes = [1, 128], strides = [1, 1]} : vector<3x128xf32> to vector<1x128xf32>
    %9 = vector.broadcast %7 : vector<288x1xf32> to vector<288x128xf32>
    %10 = vector.broadcast %8 : vector<1x128xf32> to vector<288x128xf32>
    %11 = arith.mulf %9, %10 : vector<288x128xf32>
    %12 = arith.addf %6, %11 : vector<288x128xf32>
    %c0_5 = arith.constant 0 : index
    %c2 = arith.constant 2 : index
    %13 = vector.load %arg3[%c0_5, %c2] : memref<288x3xf32, #tpu.memory_space<vmem>>, vector<288x1xf32>
    %14 = vector.extract_strided_slice %1 {offsets = [2, 0], sizes = [1, 128], strides = [1, 1]} : vector<3x128xf32> to vector<1x128xf32>
    %15 = vector.broadcast %13 : vector<288x1xf32> to vector<288x128xf32>
    %16 = vector.broadcast %14 : vector<1x128xf32> to vector<288x128xf32>
    %17 = arith.mulf %15, %16 : vector<288x128xf32>
    %18 = arith.addf %12, %17 : vector<288x128xf32>
    %c0_6 = arith.constant 0 : index
    %c0_7 = arith.constant 0 : index
    %19 = vector.load %arg5[%c0_6, %c0_7] : memref<288x1xf32, #tpu.memory_space<vmem>>, vector<288x1xf32>
    %20 = vector.broadcast %19 : vector<288x1xf32> to vector<288x128xf32>
    %21 = arith.addf %18, %20 : vector<288x128xf32>
    %cst = arith.constant 0.000000e+00 : f32
    %22 = vector.broadcast %cst : f32 to vector<288x128xf32>
    %23 = arith.maximumf %21, %22 : vector<288x128xf32>
    %24 = arith.truncf %23 : vector<288x128xf32> to vector<288x128xbf16>
    %c0_8 = arith.constant 0 : index
    %c0_9 = arith.constant 0 : index
    %25 = vector.load %arg4[%c0_8, %c0_9] : memref<288x288xbf16, #tpu.memory_space<vmem>>, vector<288x288xbf16>
    %cst_10 = arith.constant dense<0.000000e+00> : vector<288x128xf32>
    %26 = tpu.matmul %25, %24, %cst_10 {dimension_numbers = #tpu.dot_dimension_numbers<[1], [0], [0], [1], [0, 0, 1, 1], [], []>} : vector<288x288xbf16>, vector<288x128xbf16>, vector<288x128xf32> -> vector<288x128xf32>
    %c0_11 = arith.constant 0 : index
    %c0_12 = arith.constant 0 : index
    %27 = vector.load %arg6[%c0_11, %c0_12] : memref<288x1xf32, #tpu.memory_space<vmem>>, vector<288x1xf32>
    %28 = vector.broadcast %27 : vector<288x1xf32> to vector<288x128xf32>
    %29 = arith.addf %26, %28 : vector<288x128xf32>
    %c0_13 = arith.constant 0 : index
    %c0_14 = arith.constant 0 : index
    %c0_15 = arith.constant 0 : index
    %30 = vector.load %arg7[%c0_13, %c0_14, %c0_15] : memref<1x288x128xf32, #tpu.memory_space<vmem>>, vector<1x288x128xf32>
    %31 = vector.shape_cast %30 : vector<1x288x128xf32> to vector<288x128xf32>
    %32 = vector.shape_cast %29 : vector<288x128xf32> to vector<1x288x128xf32>
    tpu.vector_store %arg7[%c0_13, %c0_14, %c0_15], %32 {strides = array<i32>} : memref<1x288x128xf32, #tpu.memory_space<vmem>>, vector<1x288x128xf32>,
    return
  }
  func.func @transform_0(%arg0: i32, %arg1: i32) -> (i32, i32, i32) {
    %c0_i32 = arith.constant 0 : i32
    %c0_i32_0 = arith.constant 0 : i32
    return %arg0, %c0_i32, %arg1 : i32, i32, i32
  }
  func.func @transform_1(%arg0: i32, %arg1: i32) -> (i32, i32) {
    %c0_i32 = arith.constant 0 : i32
    %c0_i32_0 = arith.constant 0 : i32
    %c0_i32_1 = arith.constant 0 : i32
    return %c0_i32, %c0_i32_0 : i32, i32
  }
  func.func @transform_2(%arg0: i32, %arg1: i32) -> (i32, i32) {
    %c0_i32 = arith.constant 0 : i32
    %c0_i32_0 = arith.constant 0 : i32
    %c0_i32_1 = arith.constant 0 : i32
    return %c0_i32, %c0_i32_0 : i32, i32
  }
  func.func @transform_3(%arg0: i32, %arg1: i32) -> (i32, i32) {
    %c0_i32 = arith.constant 0 : i32
    %c0_i32_0 = arith.constant 0 : i32
    %c0_i32_1 = arith.constant 0 : i32
    return %c0_i32, %c0_i32_0 : i32, i32
  }
  func.func @transform_4(%arg0: i32, %arg1: i32) -> (i32, i32) {
    %c0_i32 = arith.constant 0 : i32
    %c0_i32_0 = arith.constant 0 : i32
    %c0_i32_1 = arith.constant 0 : i32
    return %c0_i32, %c0_i32_0 : i32, i32
  }
  func.func @transform_5(%arg0: i32, %arg1: i32) -> (i32, i32, i32) {
    %c0_i32 = arith.constant 0 : i32
    %c0_i32_0 = arith.constant 0 : i32
    return %arg0, %c0_i32, %arg1 : i32, i32, i32
  }
}

</mosaic_0001>

<llo_original>
// kernel: position_embedding_learned.1
$region0: #{position_embedding_learned.1}
  #allocation0 [shape = 'u32[]', space=smem, size = 0x4, offset = 0x4, fixed_abs, tag = 'smem constant byte address 0x4 - core index']
  #allocation1 [shape = 'u32[144,128]{1,0:T(1,128)}', space=vmem, size = 0x12000, scoped, tag = 'internal scratch']
  %s0 = inlined_call_operand.vmem [shape: f32[2,3,128], index: 0, kind: input, shape index: {}]
  %s1 = inlined_call_operand.vmem [shape: f32[288,3], index: 1, kind: input, shape index: {}]
  %s2 = inlined_call_operand.vmem [shape: bf16[288,288], index: 2, kind: input, shape index: {}]
  %s3 = inlined_call_operand.vmem [shape: f32[288,1], index: 3, kind: input, shape index: {}]
  %s4 = inlined_call_operand.vmem [shape: f32[288,1], index: 4, kind: input, shape index: {}]
  %s5 = inlined_call_operand.hbm [shape: f32[2,288,128], index: 5, kind: output, shape index: {}]
  %s6 = sld [smem:[#allocation0]]
  $region53: #{position_embedding_learned.1} parent=0
    _
  %s8 = ssub.s32 1, %s6
  %s9 = scalar_select 0, %s8, %s6
  $region1: #{position_embedding_learned.1} parent=0
    #allocation2 [shape = 'u8[294912]{0}', space=vmem, size = 0x48000, scoped, tag = 'output window, operand 0']
    #allocation3 [shape = 's32[2]{0}', space=sflag, size = 0x8, scoped, tag = 'scoped memory for position_embedding_learned.1']
    %10 = vsyncpa [#allocation3], 0
    %s11 = scalar_lea.sflag [#allocation3], 1
    %12 = vsyncpa %s11, 0
    loop: start=0, step=1, limit=4
    $region2: #{position_embedding_learned.1} parent=1 // loop_pre_header
      _
    $region3: #{position_embedding_learned.1} parent=1 // loop_header
      %s14 = sphi 0, %s18
      %p15 = scmp.ge.s32.totalorder %s14, 4
      %s21 = sphi 0, %s33
      %s22 = sphi 0, %s29
      %s23 = sphi 0, %s21
      %s24 = sphi 0, %s22
      %s25 = sphi 0, %s23
      %s26 = sphi 0, %s24
      %s38 = sphi 0, %s40
      %s41 = sphi 0, %s38
      %s42 = sphi 0, %s41
      %s58 = sphi 0, %s42
      %s62 = sphi 0, %s62
      %s64 = sphi 0, %s62
      %s65 = sphi 0, %s64
      %s79 = sphi 0, %s65
      %s83 = sphi 0, %s83
      %s85 = sphi 0, %s83
      %s86 = sphi 0, %s85
      %s100 = sphi 0, %s86
      %s104 = sphi 0, %s104
      %s106 = sphi 0, %s104
      %s107 = sphi 0, %s106
      %s121 = sphi 0, %s107
      %s125 = sphi 0, %s125
      %s127 = sphi 0, %s125
      %s128 = sphi 0, %s127
      %s142 = sphi 0, %s128
      %s150 = sphi 0, %s152
      %s153 = sphi 0, %s150
      %s154 = sphi 0, %s153
      %s170 = sphi 0, %s154
    $region4: #{position_embedding_learned.1} parent=1 // loop_header_branch
      %17 = sbr.rel (%p15) target = $region8
    $region5: #{position_embedding_learned.1} parent=1 // loop_body
      %s19 = ssub.s32 %s14, 1
      %s20 = ssub.s32 %s14, 2
      %s27 = sadd.s32 1, %s22
      %p28 = scmp.ge.s32.totalorder %s27, 1
      %s29 = scalar_select %p28, 0, %s27
      %s30 = sadd.s32 1, %s21
      %s31 = scalar_select %p28, %s30, %s21
      %p32 = scmp.ge.s32.totalorder %s31, 2
      %s33 = scalar_select %p32, 0, %s31
      %s34 = ssub.s32 %s21, %s33
      %s35 = ssub.s32 %s22, %s29
      %s36 = sor.u32 %s34, %s35
      %p37 = scmp.eq.s32.totalorder %s36, 0
      %s39 = sadd.s32 %s38, 1
      %s40 = scalar_select %p37, %s38, %s39
      %p43 = pneg %p37
      %p44 = scmp.eq.s32.totalorder %s14, 1
      %p45 = por %p43, %p44
      %p46 = scmp.ne.s32.totalorder %s38, %s41
      %p47 = scmp.eq.s32.totalorder %s14, 0
      %p48 = por %p46, %p47
      %p49 = scmp.ne.s32.totalorder %s38, %s41
      %p50 = scmp.eq.s32.totalorder %s19, 1
      %p51 = por %p49, %p50
      %p52 = scmp.ne.s32.totalorder %s41, %s42
      %p53 = scmp.eq.s32.totalorder %s19, 0
      %p54 = por %p52, %p53
      %p55 = scmp.ne.s32.totalorder %s41, %s42
      %p56 = scmp.eq.s32.totalorder %s20, 1
      %p57 = por %p55, %p56
      %p59 = scmp.ne.s32.totalorder %s42, %s58
      %p60 = scmp.eq.s32.totalorder %s20, 0
      %p61 = por %p59, %p60
      %s63 = sadd.s32 %s62, 1
      %p66 = scmp.eq.s32.totalorder %s14, 1
      %p67 = scmp.ne.s32.totalorder %s62, %s64
      %p68 = scmp.eq.s32.totalorder %s14, 0
      %p69 = por %p67, %p68
      %p70 = scmp.ne.s32.totalorder %s62, %s64
      %p71 = scmp.eq.s32.totalorder %s19, 1
      %p72 = por %p70, %p71
      %p73 = scmp.ne.s32.totalorder %s64, %s65
      %p74 = scmp.eq.s32.totalorder %s19, 0
      %p75 = por %p73, %p74
      %p76 = scmp.ne.s32.totalorder %s64, %s65
      %p77 = scmp.eq.s32.totalorder %s20, 1
      %p78 = por %p76, %p77
      %p80 = scmp.ne.s32.totalorder %s65, %s79
      %p81 = scmp.eq.s32.totalorder %s20, 0
      %p82 = por %p80, %p81
      %s84 = sadd.s32 %s83, 1
      %p87 = scmp.eq.s32.totalorder %s14, 1
      %p88 = scmp.ne.s32.totalorder %s83, %s85
      %p89 = scmp.eq.s32.totalorder %s14, 0
      %p90 = por %p88, %p89
      %p91 = scmp.ne.s32.totalorder %s83, %s85
      %p92 = scmp.eq.s32.totalorder %s19, 1
      %p93 = por %p91, %p92
      %p94 = scmp.ne.s32.totalorder %s85, %s86
      %p95 = scmp.eq.s32.totalorder %s19, 0
      %p96 = por %p94, %p95
      %p97 = scmp.ne.s32.totalorder %s85, %s86
      %p98 = scmp.eq.s32.totalorder %s20, 1
      %p99 = por %p97, %p98
      %p101 = scmp.ne.s32.totalorder %s86, %s100
      %p102 = scmp.eq.s32.totalorder %s20, 0
      %p103 = por %p101, %p102
      %s105 = sadd.s32 %s104, 1
      %p108 = scmp.eq.s32.totalorder %s14, 1
      %p109 = scmp.ne.s32.totalorder %s104, %s106
      %p110 = scmp.eq.s32.totalorder %s14, 0
      %p111 = por %p109, %p110
      %p112 = scmp.ne.s32.totalorder %s104, %s106
      %p113 = scmp.eq.s32.totalorder %s19, 1
      %p114 = por %p112, %p113
      %p115 = scmp.ne.s32.totalorder %s106, %s107
      %p116 = scmp.eq.s32.totalorder %s19, 0
      %p117 = por %p115, %p116
      %p118 = scmp.ne.s32.totalorder %s106, %s107
      %p119 = scmp.eq.s32.totalorder %s20, 1
      %p120 = por %p118, %p119
      %p122 = scmp.ne.s32.totalorder %s107, %s121
      %p123 = scmp.eq.s32.totalorder %s20, 0
      %p124 = por %p122, %p123
      %s126 = sadd.s32 %s125, 1
      %p129 = scmp.eq.s32.totalorder %s14, 1
      %p130 = scmp.ne.s32.totalorder %s125, %s127
      %p131 = scmp.eq.s32.totalorder %s14, 0
      %p132 = por %p130, %p131
      %p133 = scmp.ne.s32.totalorder %s125, %s127
      %p134 = scmp.eq.s32.totalorder %s19, 1
      %p135 = por %p133, %p134
      %p136 = scmp.ne.s32.totalorder %s127, %s128
      %p137 = scmp.eq.s32.totalorder %s19, 0
      %p138 = por %p136, %p137
      %p139 = scmp.ne.s32.totalorder %s127, %s128
      %p140 = scmp.eq.s32.totalorder %s20, 1
      %p141 = por %p139, %p140
      %p143 = scmp.ne.s32.totalorder %s128, %s142
      %p144 = scmp.eq.s32.totalorder %s20, 0
      %p145 = por %p143, %p144
      %s146 = ssub.s32 %s21, %s33
      %s147 = ssub.s32 %s22, %s29
      %s148 = sor.u32 %s146, %s147
      %p149 = scmp.eq.s32.totalorder %s148, 0
      %s151 = sadd.s32 %s150, 1
      %s152 = scalar_select %p149, %s150, %s151
      %p155 = pneg %p149
      %p156 = scmp.eq.s32.totalorder %s14, 1
      %p157 = por %p155, %p156
      %p158 = scmp.ne.s32.totalorder %s150, %s153
      %p159 = scmp.eq.s32.totalorder %s14, 0
      %p160 = por %p158, %p159
      %p161 = scmp.ne.s32.totalorder %s150, %s153
      %p162 = scmp.eq.s32.totalorder %s19, 1
      %p163 = por %p161, %p162
      %p164 = scmp.ne.s32.totalorder %s153, %s154
      %p165 = scmp.eq.s32.totalorder %s19, 0
      %p166 = por %p164, %p165
      %p167 = scmp.ne.s32.totalorder %s153, %s154
      %p168 = scmp.eq.s32.totalorder %s20, 1
      %p169 = por %p167, %p168
      %p171 = scmp.ne.s32.totalorder %s154, %s170
      %p172 = scmp.eq.s32.totalorder %s20, 0
      %p173 = por %p171, %p172
      %p174 = scmp.le.s32.totalorder 1, %s14
      %p175 = scmp.lt.s32.totalorder %s14, 3
      %p176 = pnand %p174, %p175
      %p177 = pneg %p176
      // Predicated region
      $region9: #{position_embedding_learned.1} parent=5 // pred_check
        _
      $region10: #{position_embedding_learned.1} parent=5 // pred_check_branch
        %179 = sbr.rel (%p176) target = $region12
      $region11: #{position_embedding_learned.1} parent=5 // pred_region
        %s180 = ssub.s32 %s14, 1
        // Predicated region
        $region13: #{position_embedding_learned.1} parent=11 // pred_check
          %p181 = pneg %p75
        $region14: #{position_embedding_learned.1} parent=11 // pred_check_branch
          %183 = sbr.rel (%p181) target = $region16
        $region15: #{position_embedding_learned.1} parent=11 // pred_region
          _
        $region16: #{position_embedding_learned.1} parent=11 // pred_fallthru
          _
        // Predicated region
        $region17: #{position_embedding_learned.1} parent=11 // pred_check
          %p184 = pneg %p96
        $region18: #{position_embedding_learned.1} parent=11 // pred_check_branch
          %186 = sbr.rel (%p184) target = $region20
        $region19: #{position_embedding_learned.1} parent=11 // pred_region
          _
        $region20: #{position_embedding_learned.1} parent=11 // pred_fallthru
          _
        // Predicated region
        $region21: #{position_embedding_learned.1} parent=11 // pred_check
          %p187 = pneg %p117
        $region22: #{position_embedding_learned.1} parent=11 // pred_check_branch
          %189 = sbr.rel (%p187) target = $region24
        $region23: #{position_embedding_learned.1} parent=11 // pred_region
          _
        $region24: #{position_embedding_learned.1} parent=11 // pred_fallthru
          _
        // Predicated region
        $region25: #{position_embedding_learned.1} parent=11 // pred_check
          %p190 = pneg %p138
        $region26: #{position_embedding_learned.1} parent=11 // pred_check_branch
          %192 = sbr.rel (%p190) target = $region28
        $region27: #{position_embedding_learned.1} parent=11 // pred_region
          _
        $region28: #{position_embedding_learned.1} parent=11 // pred_fallthru
          _
      $region12: #{position_embedding_learned.1} parent=5 // pred_fallthru
        _
      %p193 = scmp.lt.s32.totalorder %s14, 2
      // Predicated region
      $region29: #{position_embedding_learned.1} parent=5 // pred_check
        %p194 = pneg %p193
      $region30: #{position_embedding_learned.1} parent=5 // pred_check_branch
        %196 = sbr.rel (%p194) target = $region32
      $region31: #{position_embedding_learned.1} parent=5 // pred_region
        // Predicated region
        $region33: #{position_embedding_learned.1} parent=31 // pred_check
          %p197 = pneg %p48
        $region34: #{position_embedding_learned.1} parent=31 // pred_check_branch
          %199 = sbr.rel (%p197) target = $region36
        $region35: #{position_embedding_learned.1} parent=31 // pred_region
          %p200 = scmp.lt.s32.totalorder %s21, 1
          %s201 = scalar_select %p200, %s21, 1
          %p202 = scmp.lt.s32.totalorder %s22, 0
          %s203 = scalar_select %p202, %s22, 0
          %s204 = sadd.s32 %s203, %s201
          %s205 = smul.addr %s204, 4
          %s206 = scalar_lea.vmem %s0, %s205
        $region36: #{position_embedding_learned.1} parent=31 // pred_fallthru
          _
      $region32: #{position_embedding_learned.1} parent=5 // pred_fallthru
        _
      %p207 = scmp.le.s32.totalorder 1, %s14
      %p208 = scmp.lt.s32.totalorder %s14, 3
      %p209 = pnand %p207, %p208
      %p210 = pneg %p209
      // Predicated region
      $region37: #{position_embedding_learned.1} parent=5 // pred_check
        _
      $region38: #{position_embedding_learned.1} parent=5 // pred_check_branch
        %212 = sbr.rel (%p209) target = $region40
      $region39: #{position_embedding_learned.1} parent=5 // pred_region
        %s213 = ssub.s32 %s14, 1
        %p214 = scmp.lt.s32.totalorder %s23, 1
        %s215 = scalar_select %p214, %s23, 1
        %p216 = scmp.lt.s32.totalorder %s24, 0
        %s217 = scalar_select %p216, %s24, 0
        %s218 = sadd.s32 %s217, %s215
        %s219 = smul.addr %s218, 4
        %s220 = scalar_lea.vmem %s0, %s219
        %p221 = pneg %p54
        %p222 = pneg %p51
        %p223 = pneg %p75
        %p224 = pneg %p72
        %p225 = pneg %p96
        %p226 = pneg %p93
        %p227 = pneg %p117
        %p228 = pneg %p114
        %p229 = pneg %p138
        %p230 = pneg %p135
        %p231 = pneg %p166
        %p232 = pneg %p163
        %s233 = sand.u32 %s153, 1
        %s234 = scalar_lea.sflag [#allocation3], %s233
        %s235 = sand.u32 %s153, 1
        %s236 = smul.addr %s235, 288
        %s237 = scalar_lea.vmem [#allocation2], %s236
        %p238 = scmp.lt.s32.totalorder %s23, 1
        %s239 = scalar_select %p238, %s23, 1
        %p240 = scmp.lt.s32.totalorder %s24, 0
        %s241 = scalar_select %p240, %s24, 0
        %s242 = sadd.s32 %s241, %s239
        %s243 = smul.addr %s242, 4
        %s244 = scalar_lea.vmem %s0, %s243
        %v246 = vld [vmem:[%s244] sm:$0x7]
        %v247 = vld [vmem:[%s1] sm:$0xff]
        %v248 = vld [vmem:[%s1 + $0x8] sm:$0xff]
        %v249 = vld [vmem:[%s1 + $0x10] sm:$0xff]
        %v250 = vld [vmem:[%s1 + $0x18] sm:$0xff]
        %v251 = vld [vmem:[%s1 + $0x20] sm:$0xff]
        %v252 = vld [vmem:[%s1 + $0x28] sm:$0xff]
        %v253 = vld [vmem:[%s1 + $0x30] sm:$0xff]
        %v254 = vld [vmem:[%s1 + $0x38] sm:$0xff]
        %v255 = vld [vmem:[%s1 + $0x40] sm:$0xff]
        %v256 = vld [vmem:[%s1 + $0x48] sm:$0xff]
        %v257 = vld [vmem:[%s1 + $0x50] sm:$0xff]
        %v258 = vld [vmem:[%s1 + $0x58] sm:$0xff]
        %v259 = vld [vmem:[%s1 + $0x60] sm:$0xff]
        %v260 = vld [vmem:[%s1 + $0x68] sm:$0xff]
        %v261 = vld [vmem:[%s1 + $0x70] sm:$0xff]
        %v262 = vld [vmem:[%s1 + $0x78] sm:$0xff]
        %v263 = vld [vmem:[%s1 + $0x80] sm:$0xff]
        %v264 = vld [vmem:[%s1 + $0x88] sm:$0xff]
        %v265 = vld [vmem:[%s1 + $0x90] sm:$0xff]
        %v266 = vld [vmem:[%s1 + $0x98] sm:$0xff]
        %v267 = vld [vmem:[%s1 + $0xa0] sm:$0xff]
        %v268 = vld [vmem:[%s1 + $0xa8] sm:$0xff]
        %v269 = vld [vmem:[%s1 + $0xb0] sm:$0xff]
        %v270 = vld [vmem:[%s1 + $0xb8] sm:$0xff]
        %v271 = vld [vmem:[%s1 + $0xc0] sm:$0xff]
        %v272 = vld [vmem:[%s1 + $0xc8] sm:$0xff]
        %v273 = vld [vmem:[%s1 + $0xd0] sm:$0xff]
        %v274 = vld [vmem:[%s1 + $0xd8] sm:$0xff]
        %v275 = vld [vmem:[%s1 + $0xe0] sm:$0xff]
        %v276 = vld [vmem:[%s1 + $0xe8] sm:$0xff]
        %v277 = vld [vmem:[%s1 + $0xf0] sm:$0xff]
        %v278 = vld [vmem:[%s1 + $0xf8] sm:$0xff]
        %v279 = vld [vmem:[%s1 + $0x100] sm:$0xff]
        %v280 = vld [vmem:[%s1 + $0x108] sm:$0xff]
        %v281 = vld [vmem:[%s1 + $0x110] sm:$0xff]
        %v282 = vld [vmem:[%s1 + $0x118] sm:$0xff]
        %284 = vset.pattern.permute.xlu0 0
        %285 = vperm.xlu0 %284, %v247
        %v286 = vpop.permute.xlu0 %285
        %289 = vset.pattern.permute.xlu0 0
        %290 = vperm.xlu0 %289, %v248
        %v291 = vpop.permute.xlu0 %290
        %294 = vset.pattern.permute.xlu0 0
        %295 = vperm.xlu0 %294, %v249
        %v296 = vpop.permute.xlu0 %295
        %299 = vset.pattern.permute.xlu0 0
        %300 = vperm.xlu0 %299, %v250
        %v301 = vpop.permute.xlu0 %300
        %304 = vset.pattern.permute.xlu0 0
        %305 = vperm.xlu0 %304, %v251
        %v306 = vpop.permute.xlu0 %305
        %309 = vset.pattern.permute.xlu0 0
        %310 = vperm.xlu0 %309, %v252
        %v311 = vpop.permute.xlu0 %310
        %314 = vset.pattern.permute.xlu0 0
        %315 = vperm.xlu0 %314, %v253
        %v316 = vpop.permute.xlu0 %315
        %319 = vset.pattern.permute.xlu0 0
        %320 = vperm.xlu0 %319, %v254
        %v321 = vpop.permute.xlu0 %320
        %324 = vset.pattern.permute.xlu0 0
        %325 = vperm.xlu0 %324, %v255
        %v326 = vpop.permute.xlu0 %325
        %329 = vset.pattern.permute.xlu0 0
        %330 = vperm.xlu0 %329, %v256
        %v331 = vpop.permute.xlu0 %330
        %334 = vset.pattern.permute.xlu0 0
        %335 = vperm.xlu0 %334, %v257
        %v336 = vpop.permute.xlu0 %335
        %339 = vset.pattern.permute.xlu0 0
        %340 = vperm.xlu0 %339, %v258
        %v341 = vpop.permute.xlu0 %340
        %344 = vset.pattern.permute.xlu0 0
        %345 = vperm.xlu0 %344, %v259
        %v346 = vpop.permute.xlu0 %345
        %349 = vset.pattern.permute.xlu0 0
        %350 = vperm.xlu0 %349, %v260
        %v351 = vpop.permute.xlu0 %350
        %354 = vset.pattern.permute.xlu0 0
        %355 = vperm.xlu0 %354, %v261
        %v356 = vpop.permute.xlu0 %355
        %359 = vset.pattern.permute.xlu0 0
        %360 = vperm.xlu0 %359, %v262
        %v361 = vpop.permute.xlu0 %360
        %364 = vset.pattern.permute.xlu0 0
        %365 = vperm.xlu0 %364, %v263
        %v366 = vpop.permute.xlu0 %365
        %369 = vset.pattern.permute.xlu0 0
        %370 = vperm.xlu0 %369, %v264
        %v371 = vpop.permute.xlu0 %370
        %374 = vset.pattern.permute.xlu0 0
        %375 = vperm.xlu0 %374, %v265
        %v376 = vpop.permute.xlu0 %375
        %379 = vset.pattern.permute.xlu0 0
        %380 = vperm.xlu0 %379, %v266
        %v381 = vpop.permute.xlu0 %380
        %384 = vset.pattern.permute.xlu0 0
        %385 = vperm.xlu0 %384, %v267
        %v386 = vpop.permute.xlu0 %385
        %389 = vset.pattern.permute.xlu0 0
        %390 = vperm.xlu0 %389, %v268
        %v391 = vpop.permute.xlu0 %390
        %394 = vset.pattern.permute.xlu0 0
        %395 = vperm.xlu0 %394, %v269
        %v396 = vpop.permute.xlu0 %395
        %399 = vset.pattern.permute.xlu0 0
        %400 = vperm.xlu0 %399, %v270
        %v401 = vpop.permute.xlu0 %400
        %404 = vset.pattern.permute.xlu0 0
        %405 = vperm.xlu0 %404, %v271
        %v406 = vpop.permute.xlu0 %405
        %409 = vset.pattern.permute.xlu0 0
        %410 = vperm.xlu0 %409, %v272
        %v411 = vpop.permute.xlu0 %410
        %414 = vset.pattern.permute.xlu0 0
        %415 = vperm.xlu0 %414, %v273
        %v416 = vpop.permute.xlu0 %415
        %419 = vset.pattern.permute.xlu0 0
        %420 = vperm.xlu0 %419, %v274
        %v421 = vpop.permute.xlu0 %420
        %424 = vset.pattern.permute.xlu0 0
        %425 = vperm.xlu0 %424, %v275
        %v426 = vpop.permute.xlu0 %425
        %429 = vset.pattern.permute.xlu0 0
        %430 = vperm.xlu0 %429, %v276
        %v431 = vpop.permute.xlu0 %430
        %434 = vset.pattern.permute.xlu0 0
        %435 = vperm.xlu0 %434, %v277
        %v436 = vpop.permute.xlu0 %435
        %439 = vset.pattern.permute.xlu0 0
        %440 = vperm.xlu0 %439, %v278
        %v441 = vpop.permute.xlu0 %440
        %444 = vset.pattern.permute.xlu0 0
        %445 = vperm.xlu0 %444, %v279
        %v446 = vpop.permute.xlu0 %445
        %449 = vset.pattern.permute.xlu0 0
        %450 = vperm.xlu0 %449, %v280
        %v451 = vpop.permute.xlu0 %450
        %454 = vset.pattern.permute.xlu0 0
        %455 = vperm.xlu0 %454, %v281
        %v456 = vpop.permute.xlu0 %455
        %459 = vset.pattern.permute.xlu0 0
        %460 = vperm.xlu0 %459, %v282
        %v461 = vpop.permute.xlu0 %460
        %v463 = vlaneseq
        %v464 = vshrl.u32 %v463, 7
        %v465 = vsub.s32 0, %v464
        %v466 = vrot.slane %v246, %v465
        %v467 = vmul.f32 %v286, %v466
        %v468 = vmul.f32 %v291, %v466
        %v469 = vmul.f32 %v296, %v466
        %v470 = vmul.f32 %v301, %v466
        %v471 = vmul.f32 %v306, %v466
        %v472 = vmul.f32 %v311, %v466
        %v473 = vmul.f32 %v316, %v466
        %v474 = vmul.f32 %v321, %v466
        %v475 = vmul.f32 %v326, %v466
        %v476 = vmul.f32 %v331, %v466
        %v477 = vmul.f32 %v336, %v466
        %v478 = vmul.f32 %v341, %v466
        %v479 = vmul.f32 %v346, %v466
        %v480 = vmul.f32 %v351, %v466
        %v481 = vmul.f32 %v356, %v466
        %v482 = vmul.f32 %v361, %v466
        %v483 = vmul.f32 %v366, %v466
        %v484 = vmul.f32 %v371, %v466
        %v485 = vmul.f32 %v376, %v466
        %v486 = vmul.f32 %v381, %v466
        %v487 = vmul.f32 %v386, %v466
        %v488 = vmul.f32 %v391, %v466
        %v489 = vmul.f32 %v396, %v466
        %v490 = vmul.f32 %v401, %v466
        %v491 = vmul.f32 %v406, %v466
        %v492 = vmul.f32 %v411, %v466
        %v493 = vmul.f32 %v416, %v466
        %v494 = vmul.f32 %v421, %v466
        %v495 = vmul.f32 %v426, %v466
        %v496 = vmul.f32 %v431, %v466
        %v497 = vmul.f32 %v436, %v466
        %v498 = vmul.f32 %v441, %v466
        %v499 = vmul.f32 %v446, %v466
        %v500 = vmul.f32 %v451, %v466
        %v501 = vmul.f32 %v456, %v466
        %v502 = vmul.f32 %v461, %v466
        %503 = vset.pattern.permute.xlu0 1
        %504 = vperm.xlu0 %503, %v247
        %v505 = vpop.permute.xlu0 %504
        %507 = vset.pattern.permute.xlu0 1
        %508 = vperm.xlu0 %507, %v248
        %v509 = vpop.permute.xlu0 %508
        %511 = vset.pattern.permute.xlu0 1
        %512 = vperm.xlu0 %511, %v249
        %v513 = vpop.permute.xlu0 %512
        %515 = vset.pattern.permute.xlu0 1
        %516 = vperm.xlu0 %515, %v250
        %v517 = vpop.permute.xlu0 %516
        %519 = vset.pattern.permute.xlu0 1
        %520 = vperm.xlu0 %519, %v251
        %v521 = vpop.permute.xlu0 %520
        %523 = vset.pattern.permute.xlu0 1
        %524 = vperm.xlu0 %523, %v252
        %v525 = vpop.permute.xlu0 %524
        %527 = vset.pattern.permute.xlu0 1
        %528 = vperm.xlu0 %527, %v253
        %v529 = vpop.permute.xlu0 %528
        %531 = vset.pattern.permute.xlu0 1
        %532 = vperm.xlu0 %531, %v254
        %v533 = vpop.permute.xlu0 %532
        %535 = vset.pattern.permute.xlu0 1
        %536 = vperm.xlu0 %535, %v255
        %v537 = vpop.permute.xlu0 %536
        %539 = vset.pattern.permute.xlu0 1
        %540 = vperm.xlu0 %539, %v256
        %v541 = vpop.permute.xlu0 %540
        %543 = vset.pattern.permute.xlu0 1
        %544 = vperm.xlu0 %543, %v257
        %v545 = vpop.permute.xlu0 %544
        %547 = vset.pattern.permute.xlu0 1
        %548 = vperm.xlu0 %547, %v258
        %v549 = vpop.permute.xlu0 %548
        %551 = vset.pattern.permute.xlu0 1
        %552 = vperm.xlu0 %551, %v259
        %v553 = vpop.permute.xlu0 %552
        %555 = vset.pattern.permute.xlu0 1
        %556 = vperm.xlu0 %555, %v260
        %v557 = vpop.permute.xlu0 %556
        %559 = vset.pattern.permute.xlu0 1
        %560 = vperm.xlu0 %559, %v261
        %v561 = vpop.permute.xlu0 %560
        %563 = vset.pattern.permute.xlu0 1
        %564 = vperm.xlu0 %563, %v262
        %v565 = vpop.permute.xlu0 %564
        %567 = vset.pattern.permute.xlu0 1
        %568 = vperm.xlu0 %567, %v263
        %v569 = vpop.permute.xlu0 %568
        %571 = vset.pattern.permute.xlu0 1
        %572 = vperm.xlu0 %571, %v264
        %v573 = vpop.permute.xlu0 %572
        %575 = vset.pattern.permute.xlu0 1
        %576 = vperm.xlu0 %575, %v265
        %v577 = vpop.permute.xlu0 %576
        %579 = vset.pattern.permute.xlu0 1
        %580 = vperm.xlu0 %579, %v266
        %v581 = vpop.permute.xlu0 %580
        %583 = vset.pattern.permute.xlu0 1
        %584 = vperm.xlu0 %583, %v267
        %v585 = vpop.permute.xlu0 %584
        %587 = vset.pattern.permute.xlu0 1
        %588 = vperm.xlu0 %587, %v268
        %v589 = vpop.permute.xlu0 %588
        %591 = vset.pattern.permute.xlu0 1
        %592 = vperm.xlu0 %591, %v269
        %v593 = vpop.permute.xlu0 %592
        %595 = vset.pattern.permute.xlu0 1
        %596 = vperm.xlu0 %595, %v270
        %v597 = vpop.permute.xlu0 %596
        %599 = vset.pattern.permute.xlu0 1
        %600 = vperm.xlu0 %599, %v271
        %v601 = vpop.permute.xlu0 %600
        %603 = vset.pattern.permute.xlu0 1
        %604 = vperm.xlu0 %603, %v272
        %v605 = vpop.permute.xlu0 %604
        %607 = vset.pattern.permute.xlu0 1
        %608 = vperm.xlu0 %607, %v273
        %v609 = vpop.permute.xlu0 %608
        %611 = vset.pattern.permute.xlu0 1
        %612 = vperm.xlu0 %611, %v274
        %v613 = vpop.permute.xlu0 %612
        %615 = vset.pattern.permute.xlu0 1
        %616 = vperm.xlu0 %615, %v275
        %v617 = vpop.permute.xlu0 %616
        %619 = vset.pattern.permute.xlu0 1
        %620 = vperm.xlu0 %619, %v276
        %v621 = vpop.permute.xlu0 %620
        %623 = vset.pattern.permute.xlu0 1
        %624 = vperm.xlu0 %623, %v277
        %v625 = vpop.permute.xlu0 %624
        %627 = vset.pattern.permute.xlu0 1
        %628 = vperm.xlu0 %627, %v278
        %v629 = vpop.permute.xlu0 %628
        %631 = vset.pattern.permute.xlu0 1
        %632 = vperm.xlu0 %631, %v279
        %v633 = vpop.permute.xlu0 %632
        %635 = vset.pattern.permute.xlu0 1
        %636 = vperm.xlu0 %635, %v280
        %v637 = vpop.permute.xlu0 %636
        %639 = vset.pattern.permute.xlu0 1
        %640 = vperm.xlu0 %639, %v281
        %v641 = vpop.permute.xlu0 %640
        %643 = vset.pattern.permute.xlu0 1
        %644 = vperm.xlu0 %643, %v282
        %v645 = vpop.permute.xlu0 %644
        %v647 = vlaneseq
        %v648 = vshrl.u32 %v647, 7
        %v649 = vsub.s32 1, %v648
        %v650 = vrot.slane %v246, %v649
        %v651 = vmul.f32 %v505, %v650
        %v652 = vmul.f32 %v509, %v650
        %v653 = vmul.f32 %v513, %v650
        %v654 = vmul.f32 %v517, %v650
        %v655 = vmul.f32 %v521, %v650
        %v656 = vmul.f32 %v525, %v650
        %v657 = vmul.f32 %v529, %v650
        %v658 = vmul.f32 %v533, %v650
        %v659 = vmul.f32 %v537, %v650
        %v660 = vmul.f32 %v541, %v650
        %v661 = vmul.f32 %v545, %v650
        %v662 = vmul.f32 %v549, %v650
        %v663 = vmul.f32 %v553, %v650
        %v664 = vmul.f32 %v557, %v650
        %v665 = vmul.f32 %v561, %v650
        %v666 = vmul.f32 %v565, %v650
        %v667 = vmul.f32 %v569, %v650
        %v668 = vmul.f32 %v573, %v650
        %v669 = vmul.f32 %v577, %v650
        %v670 = vmul.f32 %v581, %v650
        %v671 = vmul.f32 %v585, %v650
        %v672 = vmul.f32 %v589, %v650
        %v673 = vmul.f32 %v593, %v650
        %v674 = vmul.f32 %v597, %v650
        %v675 = vmul.f32 %v601, %v650
        %v676 = vmul.f32 %v605, %v650
        %v677 = vmul.f32 %v609, %v650
        %v678 = vmul.f32 %v613, %v650
        %v679 = vmul.f32 %v617, %v650
        %v680 = vmul.f32 %v621, %v650
        %v681 = vmul.f32 %v625, %v650
        %v682 = vmul.f32 %v629, %v650
        %v683 = vmul.f32 %v633, %v650
        %v684 = vmul.f32 %v637, %v650
        %v685 = vmul.f32 %v641, %v650
        %v686 = vmul.f32 %v645, %v650
        %v687 = vadd.f32 %v467, %v651
        %v688 = vadd.f32 %v468, %v652
        %v689 = vadd.f32 %v469, %v653
        %v690 = vadd.f32 %v470, %v654
        %v691 = vadd.f32 %v471, %v655
        %v692 = vadd.f32 %v472, %v656
        %v693 = vadd.f32 %v473, %v657
        %v694 = vadd.f32 %v474, %v658
        %v695 = vadd.f32 %v475, %v659
        %v696 = vadd.f32 %v476, %v660
        %v697 = vadd.f32 %v477, %v661
        %v698 = vadd.f32 %v478, %v662
        %v699 = vadd.f32 %v479, %v663
        %v700 = vadd.f32 %v480, %v664
        %v701 = vadd.f32 %v481, %v665
        %v702 = vadd.f32 %v482, %v666
        %v703 = vadd.f32 %v483, %v667
        %v704 = vadd.f32 %v484, %v668
        %v705 = vadd.f32 %v485, %v669
        %v706 = vadd.f32 %v486, %v670
        %v707 = vadd.f32 %v487, %v671
        %v708 = vadd.f32 %v488, %v672
        %v709 = vadd.f32 %v489, %v673
        %v710 = vadd.f32 %v490, %v674
        %v711 = vadd.f32 %v491, %v675
        %v712 = vadd.f32 %v492, %v676
        %v713 = vadd.f32 %v493, %v677
        %v714 = vadd.f32 %v494, %v678
        %v715 = vadd.f32 %v495, %v679
        %v716 = vadd.f32 %v496, %v680
        %v717 = vadd.f32 %v497, %v681
        %v718 = vadd.f32 %v498, %v682
        %v719 = vadd.f32 %v499, %v683
        %v720 = vadd.f32 %v500, %v684
        %v721 = vadd.f32 %v501, %v685
        %v722 = vadd.f32 %v502, %v686
        %723 = vset.pattern.permute.xlu0 2
        %724 = vperm.xlu0 %723, %v247
        %v725 = vpop.permute.xlu0 %724
        %727 = vset.pattern.permute.xlu0 2
        %728 = vperm.xlu0 %727, %v248
        %v729 = vpop.permute.xlu0 %728
        %731 = vset.pattern.permute.xlu0 2
        %732 = vperm.xlu0 %731, %v249
        %v733 = vpop.permute.xlu0 %732
        %735 = vset.pattern.permute.xlu0 2
        %736 = vperm.xlu0 %735, %v250
        %v737 = vpop.permute.xlu0 %736
        %739 = vset.pattern.permute.xlu0 2
        %740 = vperm.xlu0 %739, %v251
        %v741 = vpop.permute.xlu0 %740
        %743 = vset.pattern.permute.xlu0 2
        %744 = vperm.xlu0 %743, %v252
        %v745 = vpop.permute.xlu0 %744
        %747 = vset.pattern.permute.xlu0 2
        %748 = vperm.xlu0 %747, %v253
        %v749 = vpop.permute.xlu0 %748
        %751 = vset.pattern.permute.xlu0 2
        %752 = vperm.xlu0 %751, %v254
        %v753 = vpop.permute.xlu0 %752
        %755 = vset.pattern.permute.xlu0 2
        %756 = vperm.xlu0 %755, %v255
        %v757 = vpop.permute.xlu0 %756
        %759 = vset.pattern.permute.xlu0 2
        %760 = vperm.xlu0 %759, %v256
        %v761 = vpop.permute.xlu0 %760
        %763 = vset.pattern.permute.xlu0 2
        %764 = vperm.xlu0 %763, %v257
        %v765 = vpop.permute.xlu0 %764
        %767 = vset.pattern.permute.xlu0 2
        %768 = vperm.xlu0 %767, %v258
        %v769 = vpop.permute.xlu0 %768
        %771 = vset.pattern.permute.xlu0 2
        %772 = vperm.xlu0 %771, %v259
        %v773 = vpop.permute.xlu0 %772
        %775 = vset.pattern.permute.xlu0 2
        %776 = vperm.xlu0 %775, %v260
        %v777 = vpop.permute.xlu0 %776
        %779 = vset.pattern.permute.xlu0 2
        %780 = vperm.xlu0 %779, %v261
        %v781 = vpop.permute.xlu0 %780
        %783 = vset.pattern.permute.xlu0 2
        %784 = vperm.xlu0 %783, %v262
        %v785 = vpop.permute.xlu0 %784
        %787 = vset.pattern.permute.xlu0 2
        %788 = vperm.xlu0 %787, %v263
        %v789 = vpop.permute.xlu0 %788
        %791 = vset.pattern.permute.xlu0 2
        %792 = vperm.xlu0 %791, %v264
        %v793 = vpop.permute.xlu0 %792
        %795 = vset.pattern.permute.xlu0 2
        %796 = vperm.xlu0 %795, %v265
        %v797 = vpop.permute.xlu0 %796
        %799 = vset.pattern.permute.xlu0 2
        %800 = vperm.xlu0 %799, %v266
        %v801 = vpop.permute.xlu0 %800
        %803 = vset.pattern.permute.xlu0 2
        %804 = vperm.xlu0 %803, %v267
        %v805 = vpop.permute.xlu0 %804
        %807 = vset.pattern.permute.xlu0 2
        %808 = vperm.xlu0 %807, %v268
        %v809 = vpop.permute.xlu0 %808
        %811 = vset.pattern.permute.xlu0 2
        %812 = vperm.xlu0 %811, %v269
        %v813 = vpop.permute.xlu0 %812
        %815 = vset.pattern.permute.xlu0 2
        %816 = vperm.xlu0 %815, %v270
        %v817 = vpop.permute.xlu0 %816
        %819 = vset.pattern.permute.xlu0 2
        %820 = vperm.xlu0 %819, %v271
        %v821 = vpop.permute.xlu0 %820
        %823 = vset.pattern.permute.xlu0 2
        %824 = vperm.xlu0 %823, %v272
        %v825 = vpop.permute.xlu0 %824
        %827 = vset.pattern.permute.xlu0 2
        %828 = vperm.xlu0 %827, %v273
        %v829 = vpop.permute.xlu0 %828
        %831 = vset.pattern.permute.xlu0 2
        %832 = vperm.xlu0 %831, %v274
        %v833 = vpop.permute.xlu0 %832
        %835 = vset.pattern.permute.xlu0 2
        %836 = vperm.xlu0 %835, %v275
        %v837 = vpop.permute.xlu0 %836
        %839 = vset.pattern.permute.xlu0 2
        %840 = vperm.xlu0 %839, %v276
        %v841 = vpop.permute.xlu0 %840
        %843 = vset.pattern.permute.xlu0 2
        %844 = vperm.xlu0 %843, %v277
        %v845 = vpop.permute.xlu0 %844
        %847 = vset.pattern.permute.xlu0 2
        %848 = vperm.xlu0 %847, %v278
        %v849 = vpop.permute.xlu0 %848
        %851 = vset.pattern.permute.xlu0 2
        %852 = vperm.xlu0 %851, %v279
        %v853 = vpop.permute.xlu0 %852
        %855 = vset.pattern.permute.xlu0 2
        %856 = vperm.xlu0 %855, %v280
        %v857 = vpop.permute.xlu0 %856
        %859 = vset.pattern.permute.xlu0 2
        %860 = vperm.xlu0 %859, %v281
        %v861 = vpop.permute.xlu0 %860
        %863 = vset.pattern.permute.xlu0 2
        %864 = vperm.xlu0 %863, %v282
        %v865 = vpop.permute.xlu0 %864
        %v867 = vlaneseq
        %v868 = vshrl.u32 %v867, 7
        %v869 = vsub.s32 2, %v868
        %v870 = vrot.slane %v246, %v869
        %v871 = vmul.f32 %v725, %v870
        %v872 = vmul.f32 %v729, %v870
        %v873 = vmul.f32 %v733, %v870
        %v874 = vmul.f32 %v737, %v870
        %v875 = vmul.f32 %v741, %v870
        %v876 = vmul.f32 %v745, %v870
        %v877 = vmul.f32 %v749, %v870
        %v878 = vmul.f32 %v753, %v870
        %v879 = vmul.f32 %v757, %v870
        %v880 = vmul.f32 %v761, %v870
        %v881 = vmul.f32 %v765, %v870
        %v882 = vmul.f32 %v769, %v870
        %v883 = vmul.f32 %v773, %v870
        %v884 = vmul.f32 %v777, %v870
        %v885 = vmul.f32 %v781, %v870
        %v886 = vmul.f32 %v785, %v870
        %v887 = vmul.f32 %v789, %v870
        %v888 = vmul.f32 %v793, %v870
        %v889 = vmul.f32 %v797, %v870
        %v890 = vmul.f32 %v801, %v870
        %v891 = vmul.f32 %v805, %v870
        %v892 = vmul.f32 %v809, %v870
        %v893 = vmul.f32 %v813, %v870
        %v894 = vmul.f32 %v817, %v870
        %v895 = vmul.f32 %v821, %v870
        %v896 = vmul.f32 %v825, %v870
        %v897 = vmul.f32 %v829, %v870
        %v898 = vmul.f32 %v833, %v870
        %v899 = vmul.f32 %v837, %v870
        %v900 = vmul.f32 %v841, %v870
        %v901 = vmul.f32 %v845, %v870
        %v902 = vmul.f32 %v849, %v870
        %v903 = vmul.f32 %v853, %v870
        %v904 = vmul.f32 %v857, %v870
        %v905 = vmul.f32 %v861, %v870
        %v906 = vmul.f32 %v865, %v870
        %v907 = vadd.f32 %v687, %v871
        %v908 = vadd.f32 %v688, %v872
        %v909 = vadd.f32 %v689, %v873
        %v910 = vadd.f32 %v690, %v874
        %v911 = vadd.f32 %v691, %v875
        %v912 = vadd.f32 %v692, %v876
        %v913 = vadd.f32 %v693, %v877
        %v914 = vadd.f32 %v694, %v878
        %v915 = vadd.f32 %v695, %v879
        %v916 = vadd.f32 %v696, %v880
        %v917 = vadd.f32 %v697, %v881
        %v918 = vadd.f32 %v698, %v882
        %v919 = vadd.f32 %v699, %v883
        %v920 = vadd.f32 %v700, %v884
        %v921 = vadd.f32 %v701, %v885
        %v922 = vadd.f32 %v702, %v886
        %v923 = vadd.f32 %v703, %v887
        %v924 = vadd.f32 %v704, %v888
        %v925 = vadd.f32 %v705, %v889
        %v926 = vadd.f32 %v706, %v890
        %v927 = vadd.f32 %v707, %v891
        %v928 = vadd.f32 %v708, %v892
        %v929 = vadd.f32 %v709, %v893
        %v930 = vadd.f32 %v710, %v894
        %v931 = vadd.f32 %v711, %v895
        %v932 = vadd.f32 %v712, %v896
        %v933 = vadd.f32 %v713, %v897
        %v934 = vadd.f32 %v714, %v898
        %v935 = vadd.f32 %v715, %v899
        %v936 = vadd.f32 %v716, %v900
        %v937 = vadd.f32 %v717, %v901
        %v938 = vadd.f32 %v718, %v902
        %v939 = vadd.f32 %v719, %v903
        %v940 = vadd.f32 %v720, %v904
        %v941 = vadd.f32 %v721, %v905
        %v942 = vadd.f32 %v722, %v906
        %v943 = vld [vmem:[%s3] sm:$0xff]
        %v944 = vld [vmem:[%s3 + $0x8] sm:$0xff]
        %v945 = vld [vmem:[%s3 + $0x10] sm:$0xff]
        %v946 = vld [vmem:[%s3 + $0x18] sm:$0xff]
        %v947 = vld [vmem:[%s3 + $0x20] sm:$0xff]
        %v948 = vld [vmem:[%s3 + $0x28] sm:$0xff]
        %v949 = vld [vmem:[%s3 + $0x30] sm:$0xff]
        %v950 = vld [vmem:[%s3 + $0x38] sm:$0xff]
        %v951 = vld [vmem:[%s3 + $0x40] sm:$0xff]
        %v952 = vld [vmem:[%s3 + $0x48] sm:$0xff]
        %v953 = vld [vmem:[%s3 + $0x50] sm:$0xff]
        %v954 = vld [vmem:[%s3 + $0x58] sm:$0xff]
        %v955 = vld [vmem:[%s3 + $0x60] sm:$0xff]
        %v956 = vld [vmem:[%s3 + $0x68] sm:$0xff]
        %v957 = vld [vmem:[%s3 + $0x70] sm:$0xff]
        %v958 = vld [vmem:[%s3 + $0x78] sm:$0xff]
        %v959 = vld [vmem:[%s3 + $0x80] sm:$0xff]
        %v960 = vld [vmem:[%s3 + $0x88] sm:$0xff]
        %v961 = vld [vmem:[%s3 + $0x90] sm:$0xff]
        %v962 = vld [vmem:[%s3 + $0x98] sm:$0xff]
        %v963 = vld [vmem:[%s3 + $0xa0] sm:$0xff]
        %v964 = vld [vmem:[%s3 + $0xa8] sm:$0xff]
        %v965 = vld [vmem:[%s3 + $0xb0] sm:$0xff]
        %v966 = vld [vmem:[%s3 + $0xb8] sm:$0xff]
        %v967 = vld [vmem:[%s3 + $0xc0] sm:$0xff]
        %v968 = vld [vmem:[%s3 + $0xc8] sm:$0xff]
        %v969 = vld [vmem:[%s3 + $0xd0] sm:$0xff]
        %v970 = vld [vmem:[%s3 + $0xd8] sm:$0xff]
        %v971 = vld [vmem:[%s3 + $0xe0] sm:$0xff]
        %v972 = vld [vmem:[%s3 + $0xe8] sm:$0xff]
        %v973 = vld [vmem:[%s3 + $0xf0] sm:$0xff]
        %v974 = vld [vmem:[%s3 + $0xf8] sm:$0xff]
        %v975 = vld [vmem:[%s3 + $0x100] sm:$0xff]
        %v976 = vld [vmem:[%s3 + $0x108] sm:$0xff]
        %v977 = vld [vmem:[%s3 + $0x110] sm:$0xff]
        %v978 = vld [vmem:[%s3 + $0x118] sm:$0xff]
        %980 = vset.pattern.permute.xlu0 0
        %981 = vperm.xlu0 %980, %v943
        %v982 = vpop.permute.xlu0 %981
        %985 = vset.pattern.permute.xlu0 0
        %986 = vperm.xlu0 %985, %v944
        %v987 = vpop.permute.xlu0 %986
        %990 = vset.pattern.permute.xlu0 0
        %991 = vperm.xlu0 %990, %v945
        %v992 = vpop.permute.xlu0 %991
        %995 = vset.pattern.permute.xlu0 0
        %996 = vperm.xlu0 %995, %v946
        %v997 = vpop.permute.xlu0 %996
        %1000 = vset.pattern.permute.xlu0 0
        %1001 = vperm.xlu0 %1000, %v947
        %v1002 = vpop.permute.xlu0 %1001
        %1005 = vset.pattern.permute.xlu0 0
        %1006 = vperm.xlu0 %1005, %v948
        %v1007 = vpop.permute.xlu0 %1006
        %1010 = vset.pattern.permute.xlu0 0
        %1011 = vperm.xlu0 %1010, %v949
        %v1012 = vpop.permute.xlu0 %1011
        %1015 = vset.pattern.permute.xlu0 0
        %1016 = vperm.xlu0 %1015, %v950
        %v1017 = vpop.permute.xlu0 %1016
        %1020 = vset.pattern.permute.xlu0 0
        %1021 = vperm.xlu0 %1020, %v951
        %v1022 = vpop.permute.xlu0 %1021
        %1025 = vset.pattern.permute.xlu0 0
        %1026 = vperm.xlu0 %1025, %v952
        %v1027 = vpop.permute.xlu0 %1026
        %1030 = vset.pattern.permute.xlu0 0
        %1031 = vperm.xlu0 %1030, %v953
        %v1032 = vpop.permute.xlu0 %1031
        %1035 = vset.pattern.permute.xlu0 0
        %1036 = vperm.xlu0 %1035, %v954
        %v1037 = vpop.permute.xlu0 %1036
        %1040 = vset.pattern.permute.xlu0 0
        %1041 = vperm.xlu0 %1040, %v955
        %v1042 = vpop.permute.xlu0 %1041
        %1045 = vset.pattern.permute.xlu0 0
        %1046 = vperm.xlu0 %1045, %v956
        %v1047 = vpop.permute.xlu0 %1046
        %1050 = vset.pattern.permute.xlu0 0
        %1051 = vperm.xlu0 %1050, %v957
        %v1052 = vpop.permute.xlu0 %1051
        %1055 = vset.pattern.permute.xlu0 0
        %1056 = vperm.xlu0 %1055, %v958
        %v1057 = vpop.permute.xlu0 %1056
        %1060 = vset.pattern.permute.xlu0 0
        %1061 = vperm.xlu0 %1060, %v959
        %v1062 = vpop.permute.xlu0 %1061
        %1065 = vset.pattern.permute.xlu0 0
        %1066 = vperm.xlu0 %1065, %v960
        %v1067 = vpop.permute.xlu0 %1066
        %1070 = vset.pattern.permute.xlu0 0
        %1071 = vperm.xlu0 %1070, %v961
        %v1072 = vpop.permute.xlu0 %1071
        %1075 = vset.pattern.permute.xlu0 0
        %1076 = vperm.xlu0 %1075, %v962
        %v1077 = vpop.permute.xlu0 %1076
        %1080 = vset.pattern.permute.xlu0 0
        %1081 = vperm.xlu0 %1080, %v963
        %v1082 = vpop.permute.xlu0 %1081
        %1085 = vset.pattern.permute.xlu0 0
        %1086 = vperm.xlu0 %1085, %v964
        %v1087 = vpop.permute.xlu0 %1086
        %1090 = vset.pattern.permute.xlu0 0
        %1091 = vperm.xlu0 %1090, %v965
        %v1092 = vpop.permute.xlu0 %1091
        %1095 = vset.pattern.permute.xlu0 0
        %1096 = vperm.xlu0 %1095, %v966
        %v1097 = vpop.permute.xlu0 %1096
        %1100 = vset.pattern.permute.xlu0 0
        %1101 = vperm.xlu0 %1100, %v967
        %v1102 = vpop.permute.xlu0 %1101
        %1105 = vset.pattern.permute.xlu0 0
        %1106 = vperm.xlu0 %1105, %v968
        %v1107 = vpop.permute.xlu0 %1106
        %1110 = vset.pattern.permute.xlu0 0
        %1111 = vperm.xlu0 %1110, %v969
        %v1112 = vpop.permute.xlu0 %1111
        %1115 = vset.pattern.permute.xlu0 0
        %1116 = vperm.xlu0 %1115, %v970
        %v1117 = vpop.permute.xlu0 %1116
        %1120 = vset.pattern.permute.xlu0 0
        %1121 = vperm.xlu0 %1120, %v971
        %v1122 = vpop.permute.xlu0 %1121
        %1125 = vset.pattern.permute.xlu0 0
        %1126 = vperm.xlu0 %1125, %v972
        %v1127 = vpop.permute.xlu0 %1126
        %1130 = vset.pattern.permute.xlu0 0
        %1131 = vperm.xlu0 %1130, %v973
        %v1132 = vpop.permute.xlu0 %1131
        %1135 = vset.pattern.permute.xlu0 0
        %1136 = vperm.xlu0 %1135, %v974
        %v1137 = vpop.permute.xlu0 %1136
        %1140 = vset.pattern.permute.xlu0 0
        %1141 = vperm.xlu0 %1140, %v975
        %v1142 = vpop.permute.xlu0 %1141
        %1145 = vset.pattern.permute.xlu0 0
        %1146 = vperm.xlu0 %1145, %v976
        %v1147 = vpop.permute.xlu0 %1146
        %1150 = vset.pattern.permute.xlu0 0
        %1151 = vperm.xlu0 %1150, %v977
        %v1152 = vpop.permute.xlu0 %1151
        %1155 = vset.pattern.permute.xlu0 0
        %1156 = vperm.xlu0 %1155, %v978
        %v1157 = vpop.permute.xlu0 %1156
        %v1159 = vadd.f32 %v907, %v982
        %v1160 = vadd.f32 %v908, %v987
        %v1161 = vadd.f32 %v909, %v992
        %v1162 = vadd.f32 %v910, %v997
        %v1163 = vadd.f32 %v911, %v1002
        %v1164 = vadd.f32 %v912, %v1007
        %v1165 = vadd.f32 %v913, %v1012
        %v1166 = vadd.f32 %v914, %v1017
        %v1167 = vadd.f32 %v915, %v1022
        %v1168 = vadd.f32 %v916, %v1027
        %v1169 = vadd.f32 %v917, %v1032
        %v1170 = vadd.f32 %v918, %v1037
        %v1171 = vadd.f32 %v919, %v1042
        %v1172 = vadd.f32 %v920, %v1047
        %v1173 = vadd.f32 %v921, %v1052
        %v1174 = vadd.f32 %v922, %v1057
        %v1175 = vadd.f32 %v923, %v1062
        %v1176 = vadd.f32 %v924, %v1067
        %v1177 = vadd.f32 %v925, %v1072
        %v1178 = vadd.f32 %v926, %v1077
        %v1179 = vadd.f32 %v927, %v1082
        %v1180 = vadd.f32 %v928, %v1087
        %v1181 = vadd.f32 %v929, %v1092
        %v1182 = vadd.f32 %v930, %v1097
        %v1183 = vadd.f32 %v931, %v1102
        %v1184 = vadd.f32 %v932, %v1107
        %v1185 = vadd.f32 %v933, %v1112
        %v1186 = vadd.f32 %v934, %v1117
        %v1187 = vadd.f32 %v935, %v1122
        %v1188 = vadd.f32 %v936, %v1127
        %v1189 = vadd.f32 %v937, %v1132
        %v1190 = vadd.f32 %v938, %v1137
        %v1191 = vadd.f32 %v939, %v1142
        %v1192 = vadd.f32 %v940, %v1147
        %v1193 = vadd.f32 %v941, %v1152
        %v1194 = vadd.f32 %v942, %v1157
        %v1195 = vmax.f32 %v1159, 0.0
        %v1196 = vmax.f32 %v1160, 0.0
        %v1197 = vmax.f32 %v1161, 0.0
        %v1198 = vmax.f32 %v1162, 0.0
        %v1199 = vmax.f32 %v1163, 0.0
        %v1200 = vmax.f32 %v1164, 0.0
        %v1201 = vmax.f32 %v1165, 0.0
        %v1202 = vmax.f32 %v1166, 0.0
        %v1203 = vmax.f32 %v1167, 0.0
        %v1204 = vmax.f32 %v1168, 0.0
        %v1205 = vmax.f32 %v1169, 0.0
        %v1206 = vmax.f32 %v1170, 0.0
        %v1207 = vmax.f32 %v1171, 0.0
        %v1208 = vmax.f32 %v1172, 0.0
        %v1209 = vmax.f32 %v1173, 0.0
        %v1210 = vmax.f32 %v1174, 0.0
        %v1211 = vmax.f32 %v1175, 0.0
        %v1212 = vmax.f32 %v1176, 0.0
        %v1213 = vmax.f32 %v1177, 0.0
        %v1214 = vmax.f32 %v1178, 0.0
        %v1215 = vmax.f32 %v1179, 0.0
        %v1216 = vmax.f32 %v1180, 0.0
        %v1217 = vmax.f32 %v1181, 0.0
        %v1218 = vmax.f32 %v1182, 0.0
        %v1219 = vmax.f32 %v1183, 0.0
        %v1220 = vmax.f32 %v1184, 0.0
        %v1221 = vmax.f32 %v1185, 0.0
        %v1222 = vmax.f32 %v1186, 0.0
        %v1223 = vmax.f32 %v1187, 0.0
        %v1224 = vmax.f32 %v1188, 0.0
        %v1225 = vmax.f32 %v1189, 0.0
        %v1226 = vmax.f32 %v1190, 0.0
        %v1227 = vmax.f32 %v1191, 0.0
        %v1228 = vmax.f32 %v1192, 0.0
        %v1229 = vmax.f32 %v1193, 0.0
        %v1230 = vmax.f32 %v1194, 0.0
        %v1231 = vpack.c.bf16 %v1196, %v1195
        %v1232 = vpack.c.bf16 %v1198, %v1197
        %v1233 = vpack.c.bf16 %v1200, %v1199
        %v1234 = vpack.c.bf16 %v1202, %v1201
        %v1235 = vpack.c.bf16 %v1204, %v1203
        %v1236 = vpack.c.bf16 %v1206, %v1205
        %v1237 = vpack.c.bf16 %v1208, %v1207
        %v1238 = vpack.c.bf16 %v1210, %v1209
        %v1239 = vpack.c.bf16 %v1212, %v1211
        %v1240 = vpack.c.bf16 %v1214, %v1213
        %v1241 = vpack.c.bf16 %v1216, %v1215
        %v1242 = vpack.c.bf16 %v1218, %v1217
        %v1243 = vpack.c.bf16 %v1220, %v1219
        %v1244 = vpack.c.bf16 %v1222, %v1221
        %v1245 = vpack.c.bf16 %v1224, %v1223
        %v1246 = vpack.c.bf16 %v1226, %v1225
        %v1247 = vpack.c.bf16 %v1228, %v1227
        %v1248 = vpack.c.bf16 %v1230, %v1229
        %v1249 = vld [vmem:[%s2] sm:$0xff]
        %v1250 = vld [vmem:[%s2 + $0x8] sm:$0xf]
        %v1251 = vld [vmem:[%s2 + $0xc] sm:$0xff]
        %v1252 = vld [vmem:[%s2 + $0x14] sm:$0xf]
        %v1253 = vld [vmem:[%s2 + $0x18] sm:$0xff]
        %v1254 = vld [vmem:[%s2 + $0x20] sm:$0xf]
        %v1255 = vld [vmem:[%s2 + $0x24] sm:$0xff]
        %v1256 = vld [vmem:[%s2 + $0x2c] sm:$0xf]
        %v1257 = vld [vmem:[%s2 + $0x30] sm:$0xff]
        %v1258 = vld [vmem:[%s2 + $0x38] sm:$0xf]
        %v1259 = vld [vmem:[%s2 + $0x3c] sm:$0xff]
        %v1260 = vld [vmem:[%s2 + $0x44] sm:$0xf]
        %v1261 = vld [vmem:[%s2 + $0x48] sm:$0xff]
        %v1262 = vld [vmem:[%s2 + $0x50] sm:$0xf]
        %v1263 = vld [vmem:[%s2 + $0x54] sm:$0xff]
        %v1264 = vld [vmem:[%s2 + $0x5c] sm:$0xf]
        %v1265 = vld [vmem:[%s2 + $0x60] sm:$0xff]
        %v1266 = vld [vmem:[%s2 + $0x68] sm:$0xf]
        %v1267 = vld [vmem:[%s2 + $0x6c] sm:$0xff]
        %v1268 = vld [vmem:[%s2 + $0x74] sm:$0xf]
        %v1269 = vld [vmem:[%s2 + $0x78] sm:$0xff]
        %v1270 = vld [vmem:[%s2 + $0x80] sm:$0xf]
        %v1271 = vld [vmem:[%s2 + $0x84] sm:$0xff]
        %v1272 = vld [vmem:[%s2 + $0x8c] sm:$0xf]
        %v1273 = vld [vmem:[%s2 + $0x90] sm:$0xff]
        %v1274 = vld [vmem:[%s2 + $0x98] sm:$0xf]
        %v1275 = vld [vmem:[%s2 + $0x9c] sm:$0xff]
        %v1276 = vld [vmem:[%s2 + $0xa4] sm:$0xf]
        %v1277 = vld [vmem:[%s2 + $0xa8] sm:$0xff]
        %v1278 = vld [vmem:[%s2 + $0xb0] sm:$0xf]
        %v1279 = vld [vmem:[%s2 + $0xb4] sm:$0xff]
        %v1280 = vld [vmem:[%s2 + $0xbc] sm:$0xf]
        %v1281 = vld [vmem:[%s2 + $0xc0] sm:$0xff]
        %v1282 = vld [vmem:[%s2 + $0xc8] sm:$0xf]
        %v1283 = vld [vmem:[%s2 + $0xcc] sm:$0xff]
        %v1284 = vld [vmem:[%s2 + $0xd4] sm:$0xf]
        %v1285 = vld [vmem:[%s2 + $0xd8] sm:$0xff]
        %v1286 = vld [vmem:[%s2 + $0xe0] sm:$0xf]
        %v1287 = vld [vmem:[%s2 + $0xe4] sm:$0xff]
        %v1288 = vld [vmem:[%s2 + $0xec] sm:$0xf]
        %v1289 = vld [vmem:[%s2 + $0xf0] sm:$0xff]
        %v1290 = vld [vmem:[%s2 + $0xf8] sm:$0xf]
        %v1291 = vld [vmem:[%s2 + $0xfc] sm:$0xff]
        %v1292 = vld [vmem:[%s2 + $0x104] sm:$0xf]
        %v1293 = vld [vmem:[%s2 + $0x108] sm:$0xff]
        %v1294 = vld [vmem:[%s2 + $0x110] sm:$0xf]
        %v1295 = vld [vmem:[%s2 + $0x114] sm:$0xff]
        %v1296 = vld [vmem:[%s2 + $0x11c] sm:$0xf]
        %v1297 = vld [vmem:[%s2 + $0x120] sm:$0xff]
        %v1298 = vld [vmem:[%s2 + $0x128] sm:$0xf]
        %v1299 = vld [vmem:[%s2 + $0x12c] sm:$0xff]
        %v1300 = vld [vmem:[%s2 + $0x134] sm:$0xf]
        %v1301 = vld [vmem:[%s2 + $0x138] sm:$0xff]
        %v1302 = vld [vmem:[%s2 + $0x140] sm:$0xf]
        %v1303 = vld [vmem:[%s2 + $0x144] sm:$0xff]
        %v1304 = vld [vmem:[%s2 + $0x14c] sm:$0xf]
        %v1305 = vld [vmem:[%s2 + $0x150] sm:$0xff]
        %v1306 = vld [vmem:[%s2 + $0x158] sm:$0xf]
        %v1307 = vld [vmem:[%s2 + $0x15c] sm:$0xff]
        %v1308 = vld [vmem:[%s2 + $0x164] sm:$0xf]
        %v1309 = vld [vmem:[%s2 + $0x168] sm:$0xff]
        %v1310 = vld [vmem:[%s2 + $0x170] sm:$0xf]
        %v1311 = vld [vmem:[%s2 + $0x174] sm:$0xff]
        %v1312 = vld [vmem:[%s2 + $0x17c] sm:$0xf]
        %v1313 = vld [vmem:[%s2 + $0x180] sm:$0xff]
        %v1314 = vld [vmem:[%s2 + $0x188] sm:$0xf]
        %v1315 = vld [vmem:[%s2 + $0x18c] sm:$0xff]
        %v1316 = vld [vmem:[%s2 + $0x194] sm:$0xf]
        %v1317 = vld [vmem:[%s2 + $0x198] sm:$0xff]
        %v1318 = vld [vmem:[%s2 + $0x1a0] sm:$0xf]
        %v1319 = vld [vmem:[%s2 + $0x1a4] sm:$0xff]
        %v1320 = vld [vmem:[%s2 + $0x1ac] sm:$0xf]
        %v1321 = vld [vmem:[%s4] sm:$0xff]
        %v1322 = vld [vmem:[%s4 + $0x8] sm:$0xff]
        %v1323 = vld [vmem:[%s4 + $0x10] sm:$0xff]
        %v1324 = vld [vmem:[%s4 + $0x18] sm:$0xff]
        %v1325 = vld [vmem:[%s4 + $0x20] sm:$0xff]
        %v1326 = vld [vmem:[%s4 + $0x28] sm:$0xff]
        %v1327 = vld [vmem:[%s4 + $0x30] sm:$0xff]
        %v1328 = vld [vmem:[%s4 + $0x38] sm:$0xff]
        %v1329 = vld [vmem:[%s4 + $0x40] sm:$0xff]
        %v1330 = vld [vmem:[%s4 + $0x48] sm:$0xff]
        %v1331 = vld [vmem:[%s4 + $0x50] sm:$0xff]
        %v1332 = vld [vmem:[%s4 + $0x58] sm:$0xff]
        %v1333 = vld [vmem:[%s4 + $0x60] sm:$0xff]
        %v1334 = vld [vmem:[%s4 + $0x68] sm:$0xff]
        %v1335 = vld [vmem:[%s4 + $0x70] sm:$0xff]
        %v1336 = vld [vmem:[%s4 + $0x78] sm:$0xff]
        %v1337 = vld [vmem:[%s4 + $0x80] sm:$0xff]
        %v1338 = vld [vmem:[%s4 + $0x88] sm:$0xff]
        %v1339 = vld [vmem:[%s4 + $0x90] sm:$0xff]
        %v1340 = vld [vmem:[%s4 + $0x98] sm:$0xff]
        %v1341 = vld [vmem:[%s4 + $0xa0] sm:$0xff]
        %v1342 = vld [vmem:[%s4 + $0xa8] sm:$0xff]
        %v1343 = vld [vmem:[%s4 + $0xb0] sm:$0xff]
        %v1344 = vld [vmem:[%s4 + $0xb8] sm:$0xff]
        %v1345 = vld [vmem:[%s4 + $0xc0] sm:$0xff]
        %v1346 = vld [vmem:[%s4 + $0xc8] sm:$0xff]
        %v1347 = vld [vmem:[%s4 + $0xd0] sm:$0xff]
        %v1348 = vld [vmem:[%s4 + $0xd8] sm:$0xff]
        %v1349 = vld [vmem:[%s4 + $0xe0] sm:$0xff]
        %v1350 = vld [vmem:[%s4 + $0xe8] sm:$0xff]
        %v1351 = vld [vmem:[%s4 + $0xf0] sm:$0xff]
        %v1352 = vld [vmem:[%s4 + $0xf8] sm:$0xff]
        %v1353 = vld [vmem:[%s4 + $0x100] sm:$0xff]
        %v1354 = vld [vmem:[%s4 + $0x108] sm:$0xff]
        %v1355 = vld [vmem:[%s4 + $0x110] sm:$0xff]
        %v1356 = vld [vmem:[%s4 + $0x118] sm:$0xff]
        %1358 = vset.pattern.permute.xlu0 0
        %1359 = vperm.xlu0 %1358, %v1321
        %v1360 = vpop.permute.xlu0 %1359
        %1363 = vset.pattern.permute.xlu0 0
        %1364 = vperm.xlu0 %1363, %v1322
        %v1365 = vpop.permute.xlu0 %1364
        %1368 = vset.pattern.permute.xlu0 0
        %1369 = vperm.xlu0 %1368, %v1323
        %v1370 = vpop.permute.xlu0 %1369
        %1373 = vset.pattern.permute.xlu0 0
        %1374 = vperm.xlu0 %1373, %v1324
        %v1375 = vpop.permute.xlu0 %1374
        %1378 = vset.pattern.permute.xlu0 0
        %1379 = vperm.xlu0 %1378, %v1325
        %v1380 = vpop.permute.xlu0 %1379
        %1383 = vset.pattern.permute.xlu0 0
        %1384 = vperm.xlu0 %1383, %v1326
        %v1385 = vpop.permute.xlu0 %1384
        %1388 = vset.pattern.permute.xlu0 0
        %1389 = vperm.xlu0 %1388, %v1327
        %v1390 = vpop.permute.xlu0 %1389
        %1393 = vset.pattern.permute.xlu0 0
        %1394 = vperm.xlu0 %1393, %v1328
        %v1395 = vpop.permute.xlu0 %1394
        %1398 = vset.pattern.permute.xlu0 0
        %1399 = vperm.xlu0 %1398, %v1329
        %v1400 = vpop.permute.xlu0 %1399
        %1403 = vset.pattern.permute.xlu0 0
        %1404 = vperm.xlu0 %1403, %v1330
        %v1405 = vpop.permute.xlu0 %1404
        %1408 = vset.pattern.permute.xlu0 0
        %1409 = vperm.xlu0 %1408, %v1331
        %v1410 = vpop.permute.xlu0 %1409
        %1413 = vset.pattern.permute.xlu0 0
        %1414 = vperm.xlu0 %1413, %v1332
        %v1415 = vpop.permute.xlu0 %1414
        %1418 = vset.pattern.permute.xlu0 0
        %1419 = vperm.xlu0 %1418, %v1333
        %v1420 = vpop.permute.xlu0 %1419
        %1423 = vset.pattern.permute.xlu0 0
        %1424 = vperm.xlu0 %1423, %v1334
        %v1425 = vpop.permute.xlu0 %1424
        %1428 = vset.pattern.permute.xlu0 0
        %1429 = vperm.xlu0 %1428, %v1335
        %v1430 = vpop.permute.xlu0 %1429
        %1433 = vset.pattern.permute.xlu0 0
        %1434 = vperm.xlu0 %1433, %v1336
        %v1435 = vpop.permute.xlu0 %1434
        %1438 = vset.pattern.permute.xlu0 0
        %1439 = vperm.xlu0 %1438, %v1337
        %v1440 = vpop.permute.xlu0 %1439
        %1443 = vset.pattern.permute.xlu0 0
        %1444 = vperm.xlu0 %1443, %v1338
        %v1445 = vpop.permute.xlu0 %1444
        %1448 = vset.pattern.permute.xlu0 0
        %1449 = vperm.xlu0 %1448, %v1339
        %v1450 = vpop.permute.xlu0 %1449
        %1453 = vset.pattern.permute.xlu0 0
        %1454 = vperm.xlu0 %1453, %v1340
        %v1455 = vpop.permute.xlu0 %1454
        %1458 = vset.pattern.permute.xlu0 0
        %1459 = vperm.xlu0 %1458, %v1341
        %v1460 = vpop.permute.xlu0 %1459
        %1463 = vset.pattern.permute.xlu0 0
        %1464 = vperm.xlu0 %1463, %v1342
        %v1465 = vpop.permute.xlu0 %1464
        %1468 = vset.pattern.permute.xlu0 0
        %1469 = vperm.xlu0 %1468, %v1343
        %v1470 = vpop.permute.xlu0 %1469
        %1473 = vset.pattern.permute.xlu0 0
        %1474 = vperm.xlu0 %1473, %v1344
        %v1475 = vpop.permute.xlu0 %1474
        %1478 = vset.pattern.permute.xlu0 0
        %1479 = vperm.xlu0 %1478, %v1345
        %v1480 = vpop.permute.xlu0 %1479
        %1483 = vset.pattern.permute.xlu0 0
        %1484 = vperm.xlu0 %1483, %v1346
        %v1485 = vpop.permute.xlu0 %1484
        %1488 = vset.pattern.permute.xlu0 0
        %1489 = vperm.xlu0 %1488, %v1347
        %v1490 = vpop.permute.xlu0 %1489
        %1493 = vset.pattern.permute.xlu0 0
        %1494 = vperm.xlu0 %1493, %v1348
        %v1495 = vpop.permute.xlu0 %1494
        %1498 = vset.pattern.permute.xlu0 0
        %1499 = vperm.xlu0 %1498, %v1349
        %v1500 = vpop.permute.xlu0 %1499
        %1503 = vset.pattern.permute.xlu0 0
        %1504 = vperm.xlu0 %1503, %v1350
        %v1505 = vpop.permute.xlu0 %1504
        %1508 = vset.pattern.permute.xlu0 0
        %1509 = vperm.xlu0 %1508, %v1351
        %v1510 = vpop.permute.xlu0 %1509
        %1513 = vset.pattern.permute.xlu0 0
        %1514 = vperm.xlu0 %1513, %v1352
        %v1515 = vpop.permute.xlu0 %1514
        %1518 = vset.pattern.permute.xlu0 0
        %1519 = vperm.xlu0 %1518, %v1353
        %v1520 = vpop.permute.xlu0 %1519
        %1523 = vset.pattern.permute.xlu0 0
        %1524 = vperm.xlu0 %1523, %v1354
        %v1525 = vpop.permute.xlu0 %1524
        %1528 = vset.pattern.permute.xlu0 0
        %1529 = vperm.xlu0 %1528, %v1355
        %v1530 = vpop.permute.xlu0 %1529
        %1533 = vset.pattern.permute.xlu0 0
        %1534 = vperm.xlu0 %1533, %v1356
        %v1535 = vpop.permute.xlu0 %1534
        %v1609 = vunpack.c.l.b16 %v1249
        %v1610 = vunpack.c.h.b16 %v1249
        %v1611 = vunpack.c.l.b16 %v1250
        %v1612 = vunpack.c.l.b16 %v1251
        %v1613 = vunpack.c.h.b16 %v1251
        %v1614 = vunpack.c.l.b16 %v1252
        %v1615 = vunpack.c.l.b16 %v1253
        %v1616 = vunpack.c.h.b16 %v1253
        %v1617 = vunpack.c.l.b16 %v1254
        %v1618 = vunpack.c.l.b16 %v1255
        %v1619 = vunpack.c.h.b16 %v1255
        %v1620 = vunpack.c.l.b16 %v1256
        %v1621 = vunpack.c.l.b16 %v1257
        %v1622 = vunpack.c.h.b16 %v1257
        %v1623 = vunpack.c.l.b16 %v1258
        %v1624 = vunpack.c.l.b16 %v1259
        %v1625 = vunpack.c.h.b16 %v1259
        %v1626 = vunpack.c.l.b16 %v1260
        %v1627 = vunpack.c.l.b16 %v1261
        %v1628 = vunpack.c.h.b16 %v1261
        %v1629 = vunpack.c.l.b16 %v1262
        %v1630 = vunpack.c.l.b16 %v1263
        %v1631 = vunpack.c.h.b16 %v1263
        %v1632 = vunpack.c.l.b16 %v1264
        %v1633 = vunpack.c.l.b16 %v1265
        %v1634 = vunpack.c.h.b16 %v1265
        %v1635 = vunpack.c.l.b16 %v1266
        %v1636 = vunpack.c.l.b16 %v1267
        %v1637 = vunpack.c.h.b16 %v1267
        %v1638 = vunpack.c.l.b16 %v1268
        %v1639 = vunpack.c.l.b16 %v1269
        %v1640 = vunpack.c.h.b16 %v1269
        %v1641 = vunpack.c.l.b16 %v1270
        %v1642 = vunpack.c.l.b16 %v1271
        %v1643 = vunpack.c.h.b16 %v1271
        %v1644 = vunpack.c.l.b16 %v1272
        %v1645 = vunpack.c.l.b16 %v1273
        %v1646 = vunpack.c.h.b16 %v1273
        %v1647 = vunpack.c.l.b16 %v1274
        %v1648 = vunpack.c.l.b16 %v1275
        %v1649 = vunpack.c.h.b16 %v1275
        %v1650 = vunpack.c.l.b16 %v1276
        %v1651 = vunpack.c.l.b16 %v1277
        %v1652 = vunpack.c.h.b16 %v1277
        %v1653 = vunpack.c.l.b16 %v1278
        %v1654 = vunpack.c.l.b16 %v1279
        %v1655 = vunpack.c.h.b16 %v1279
        %v1656 = vunpack.c.l.b16 %v1280
        %v1657 = vunpack.c.l.b16 %v1281
        %v1658 = vunpack.c.h.b16 %v1281
        %v1659 = vunpack.c.l.b16 %v1282
        %v1660 = vunpack.c.l.b16 %v1283
        %v1661 = vunpack.c.h.b16 %v1283
        %v1662 = vunpack.c.l.b16 %v1284
        %v1663 = vunpack.c.l.b16 %v1285
        %v1664 = vunpack.c.h.b16 %v1285
        %v1665 = vunpack.c.l.b16 %v1286
        %v1666 = vunpack.c.l.b16 %v1287
        %v1667 = vunpack.c.h.b16 %v1287
        %v1668 = vunpack.c.l.b16 %v1288
        %v1669 = vunpack.c.l.b16 %v1289
        %v1670 = vunpack.c.h.b16 %v1289
        %v1671 = vunpack.c.l.b16 %v1290
        %v1672 = vunpack.c.l.b16 %v1291
        %v1673 = vunpack.c.h.b16 %v1291
        %v1674 = vunpack.c.l.b16 %v1292
        %v1675 = vunpack.c.l.b16 %v1293
        %v1676 = vunpack.c.h.b16 %v1293
        %v1677 = vunpack.c.l.b16 %v1294
        %v1678 = vunpack.c.l.b16 %v1295
        %v1679 = vunpack.c.h.b16 %v1295
        %v1680 = vunpack.c.l.b16 %v1296
        %v1681 = vunpack.c.l.b16 %v1297
        %v1682 = vunpack.c.h.b16 %v1297
        %v1683 = vunpack.c.l.b16 %v1298
        %v1684 = vunpack.c.l.b16 %v1299
        %v1685 = vunpack.c.h.b16 %v1299
        %v1686 = vunpack.c.l.b16 %v1300
        %v1687 = vunpack.c.l.b16 %v1301
        %v1688 = vunpack.c.h.b16 %v1301
        %v1689 = vunpack.c.l.b16 %v1302
        %v1690 = vunpack.c.l.b16 %v1303
        %v1691 = vunpack.c.h.b16 %v1303
        %v1692 = vunpack.c.l.b16 %v1304
        %v1693 = vunpack.c.l.b16 %v1305
        %v1694 = vunpack.c.h.b16 %v1305
        %v1695 = vunpack.c.l.b16 %v1306
        %v1696 = vunpack.c.l.b16 %v1307
        %v1697 = vunpack.c.h.b16 %v1307
        %v1698 = vunpack.c.l.b16 %v1308
        %v1699 = vunpack.c.l.b16 %v1309
        %v1700 = vunpack.c.h.b16 %v1309
        %v1701 = vunpack.c.l.b16 %v1310
        %v1702 = vunpack.c.l.b16 %v1311
        %v1703 = vunpack.c.h.b16 %v1311
        %v1704 = vunpack.c.l.b16 %v1312
        %v1705 = vunpack.c.l.b16 %v1313
        %v1706 = vunpack.c.h.b16 %v1313
        %v1707 = vunpack.c.l.b16 %v1314
        %v1708 = vunpack.c.l.b16 %v1315
        %v1709 = vunpack.c.h.b16 %v1315
        %v1710 = vunpack.c.l.b16 %v1316
        %v1711 = vunpack.c.l.b16 %v1317
        %v1712 = vunpack.c.h.b16 %v1317
        %v1713 = vunpack.c.l.b16 %v1318
        %v1714 = vunpack.c.l.b16 %v1319
        %v1715 = vunpack.c.h.b16 %v1319
        %v1716 = vunpack.c.l.b16 %v1320
        %v1717 = vpack.c.b16 %v1612, %v1609
        %v1718 = vpack.c.b16 %v1613, %v1610
        %v1719 = vpack.c.b16 %v1614, %v1611
        %v1720 = vpack.c.b16 %v1618, %v1615
        %v1721 = vpack.c.b16 %v1619, %v1616
        %v1722 = vpack.c.b16 %v1620, %v1617
        %v1723 = vpack.c.b16 %v1624, %v1621
        %v1724 = vpack.c.b16 %v1625, %v1622
        %v1725 = vpack.c.b16 %v1626, %v1623
        %v1726 = vpack.c.b16 %v1630, %v1627
        %v1727 = vpack.c.b16 %v1631, %v1628
        %v1728 = vpack.c.b16 %v1632, %v1629
        %v1729 = vpack.c.b16 %v1636, %v1633
        %v1730 = vpack.c.b16 %v1637, %v1634
        %v1731 = vpack.c.b16 %v1638, %v1635
        %v1732 = vpack.c.b16 %v1642, %v1639
        %v1733 = vpack.c.b16 %v1643, %v1640
        %v1734 = vpack.c.b16 %v1644, %v1641
        %v1735 = vpack.c.b16 %v1648, %v1645
        %v1736 = vpack.c.b16 %v1649, %v1646
        %v1737 = vpack.c.b16 %v1650, %v1647
        %v1738 = vpack.c.b16 %v1654, %v1651
        %v1739 = vpack.c.b16 %v1655, %v1652
        %v1740 = vpack.c.b16 %v1656, %v1653
        %v1741 = vpack.c.b16 %v1660, %v1657
        %v1742 = vpack.c.b16 %v1661, %v1658
        %v1743 = vpack.c.b16 %v1662, %v1659
        %v1744 = vpack.c.b16 %v1666, %v1663
        %v1745 = vpack.c.b16 %v1667, %v1664
        %v1746 = vpack.c.b16 %v1668, %v1665
        %v1747 = vpack.c.b16 %v1672, %v1669
        %v1748 = vpack.c.b16 %v1673, %v1670
        %v1749 = vpack.c.b16 %v1674, %v1671
        %v1750 = vpack.c.b16 %v1678, %v1675
        %v1751 = vpack.c.b16 %v1679, %v1676
        %v1752 = vpack.c.b16 %v1680, %v1677
        %v1753 = vpack.c.b16 %v1684, %v1681
        %v1754 = vpack.c.b16 %v1685, %v1682
        %v1755 = vpack.c.b16 %v1686, %v1683
        %v1756 = vpack.c.b16 %v1690, %v1687
        %v1757 = vpack.c.b16 %v1691, %v1688
        %v1758 = vpack.c.b16 %v1692, %v1689
        %v1759 = vpack.c.b16 %v1696, %v1693
        %v1760 = vpack.c.b16 %v1697, %v1694
        %v1761 = vpack.c.b16 %v1698, %v1695
        %v1762 = vpack.c.b16 %v1702, %v1699
        %v1763 = vpack.c.b16 %v1703, %v1700
        %v1764 = vpack.c.b16 %v1704, %v1701
        %v1765 = vpack.c.b16 %v1708, %v1705
        %v1766 = vpack.c.b16 %v1709, %v1706
        %v1767 = vpack.c.b16 %v1710, %v1707
        %v1768 = vpack.c.b16 %v1714, %v1711
        %v1769 = vpack.c.b16 %v1715, %v1712
        %v1770 = vpack.c.b16 %v1716, %v1713
        %vm1807 = vcmask 261120
        %v1809 = vsel %vm1807, %v1719, 0
        %v1812 = vsel %vm1807, %v1722, 0
        %v1815 = vsel %vm1807, %v1725, 0
        %v1818 = vsel %vm1807, %v1728, 0
        %v1821 = vsel %vm1807, %v1731, 0
        %v1824 = vsel %vm1807, %v1734, 0
        %v1827 = vsel %vm1807, %v1737, 0
        %v1830 = vsel %vm1807, %v1740, 0
        %v1833 = vsel %vm1807, %v1743, 0
        %v1836 = vsel %vm1807, %v1746, 0
        %v1839 = vsel %vm1807, %v1749, 0
        %v1842 = vsel %vm1807, %v1752, 0
        %v1845 = vsel %vm1807, %v1755, 0
        %v1848 = vsel %vm1807, %v1758, 0
        %v1851 = vsel %vm1807, %v1761, 0
        %v1854 = vsel %vm1807, %v1764, 0
        %v1857 = vsel %vm1807, %v1767, 0
        %v1860 = vsel %vm1807, %v1770, 0
        %1862 = vmatprep.subr.bf16.mxu0 0
        %1863 = vmatpush1.bf16.msra.mxu0 %v1238
        %1864 = vmatprep.subr.bf16.mxu0 0
        %1865 = vmatpush1.bf16.msra.mxu0 %v1237
        %1866 = vmatprep.subr.bf16.mxu0 0
        %1867 = vmatpush1.bf16.msra.mxu0 %v1236
        %1868 = vmatprep.subr.bf16.mxu0 0
        %1869 = vmatpush1.bf16.msra.mxu0 %v1235
        %1870 = vmatprep.subr.bf16.mxu0 0
        %1871 = vmatpush1.bf16.msra.mxu0 %v1234
        %1872 = vmatprep.subr.bf16.mxu0 0
        %1873 = vmatpush1.bf16.msra.mxu0 %v1233
        %1874 = vmatprep.subr.bf16.mxu0 0
        %1875 = vmatpush1.bf16.msra.mxu0 %v1232
        %1876 = vmatprep.subr.bf16.mxu0 0
        %1877 = vmatpush1.bf16.msra.mxu0 %v1231
        %1878 = vmatprep.subr.bf16.mxu0 0
        %1879 = vmatpush2.bf16.msra.mxu0 %v1246
        %1880 = vmatprep.subr.bf16.mxu0 0
        %1881 = vmatpush2.bf16.msra.mxu0 %v1245
        %1882 = vmatprep.subr.bf16.mxu0 0
        %1883 = vmatpush2.bf16.msra.mxu0 %v1244
        %1884 = vmatprep.subr.bf16.mxu0 0
        %1885 = vmatpush2.bf16.msra.mxu0 %v1243
        %1886 = vmatprep.subr.bf16.mxu0 0
        %1887 = vmatpush2.bf16.msra.mxu0 %v1242
        %1888 = vmatprep.subr.bf16.mxu0 0
        %1889 = vmatpush2.bf16.msra.mxu0 %v1241
        %1890 = vmatprep.subr.bf16.mxu0 0
        %1891 = vmatpush2.bf16.msra.mxu0 %v1240
        %1892 = vmatprep.subr.bf16.mxu0 0
        %1893 = vmatpush2.bf16.msra.mxu0 %v1239
        %1894 = vmatprep.mubr.bf16.mxu0 %v1718
        %1895 = vmatmul.mubr.bf16.gmra.mxu0 %v1717
        %v1896 = vpop.f32.mrf.mxu0
        %v1897 = vadd.f32 %v1360, %v1896
        %v1898 = vpop.f32.mrf.mxu0
        %v1899 = vpop.f32.mrf.mxu0
        %v1900 = vadd.f32 %v1365, %v1899
        %v1901 = vpop.f32.mrf.mxu0
        %1902 = vmatprep.mubr.bf16.mxu0 %v1721
        %1903 = vmatmul.mubr.bf16.gmra.mxu0 %v1720
        %v1904 = vpop.f32.mrf.mxu0
        %v1905 = vadd.f32 %v1370, %v1904
        %v1906 = vpop.f32.mrf.mxu0
        %v1907 = vpop.f32.mrf.mxu0
        %v1908 = vadd.f32 %v1375, %v1907
        %v1909 = vpop.f32.mrf.mxu0
        %1910 = vmatprep.mubr.bf16.mxu0 %v1724
        %1911 = vmatmul.mubr.bf16.gmra.mxu0 %v1723
        %v1912 = vpop.f32.mrf.mxu0
        %v1913 = vadd.f32 %v1380, %v1912
        %v1914 = vpop.f32.mrf.mxu0
        %v1915 = vpop.f32.mrf.mxu0
        %v1916 = vadd.f32 %v1385, %v1915
        %v1917 = vpop.f32.mrf.mxu0
        %1918 = vmatprep.mubr.bf16.mxu0 %v1727
        %1919 = vmatmul.mubr.bf16.gmra.mxu0 %v1726
        %v1920 = vpop.f32.mrf.mxu0
        %v1921 = vadd.f32 %v1390, %v1920
        %v1922 = vpop.f32.mrf.mxu0
        %v1923 = vpop.f32.mrf.mxu0
        %v1924 = vadd.f32 %v1395, %v1923
        %v1925 = vpop.f32.mrf.mxu0
        %1926 = vmatprep.mubr.bf16.mxu0 %v1730
        %1927 = vmatmul.mubr.bf16.gmra.mxu0 %v1729
        %v1928 = vpop.f32.mrf.mxu0
        %v1929 = vadd.f32 %v1400, %v1928
        %v1930 = vpop.f32.mrf.mxu0
        %v1931 = vpop.f32.mrf.mxu0
        %v1932 = vadd.f32 %v1405, %v1931
        %v1933 = vpop.f32.mrf.mxu0
        %1934 = vmatprep.mubr.bf16.mxu0 %v1733
        %1935 = vmatmul.mubr.bf16.gmra.mxu0 %v1732
        %v1936 = vpop.f32.mrf.mxu0
        %v1937 = vadd.f32 %v1410, %v1936
        %v1938 = vpop.f32.mrf.mxu0
        %v1939 = vpop.f32.mrf.mxu0
        %v1940 = vadd.f32 %v1415, %v1939
        %v1941 = vpop.f32.mrf.mxu0
        %1942 = vmatprep.mubr.bf16.mxu0 %v1736
        %1943 = vmatmul.mubr.bf16.gmra.mxu0 %v1735
        %v1944 = vpop.f32.mrf.mxu0
        %v1945 = vadd.f32 %v1420, %v1944
        %v1946 = vpop.f32.mrf.mxu0
        %v1947 = vpop.f32.mrf.mxu0
        %v1948 = vadd.f32 %v1425, %v1947
        %v1949 = vpop.f32.mrf.mxu0
        %1950 = vmatprep.mubr.bf16.mxu0 %v1739
        %1951 = vmatmul.mubr.bf16.gmra.mxu0 %v1738
        %v1952 = vpop.f32.mrf.mxu0
        %v1953 = vadd.f32 %v1430, %v1952
        %v1954 = vpop.f32.mrf.mxu0
        %v1955 = vpop.f32.mrf.mxu0
        %v1956 = vadd.f32 %v1435, %v1955
        %v1957 = vpop.f32.mrf.mxu0
        %1958 = vmatprep.mubr.bf16.mxu0 %v1742
        %1959 = vmatmul.mubr.bf16.gmra.mxu0 %v1741
        %v1960 = vpop.f32.mrf.mxu0
        %v1961 = vadd.f32 %v1440, %v1960
        %v1962 = vpop.f32.mrf.mxu0
        %v1963 = vpop.f32.mrf.mxu0
        %v1964 = vadd.f32 %v1445, %v1963
        %v1965 = vpop.f32.mrf.mxu0
        %1966 = vmatprep.mubr.bf16.mxu0 %v1745
        %1967 = vmatmul.mubr.bf16.gmra.mxu0 %v1744
        %v1968 = vpop.f32.mrf.mxu0
        %v1969 = vadd.f32 %v1450, %v1968
        %v1970 = vpop.f32.mrf.mxu0
        %v1971 = vpop.f32.mrf.mxu0
        %v1972 = vadd.f32 %v1455, %v1971
        %v1973 = vpop.f32.mrf.mxu0
        %1974 = vmatprep.mubr.bf16.mxu0 %v1748
        %1975 = vmatmul.mubr.bf16.gmra.mxu0 %v1747
        %v1976 = vpop.f32.mrf.mxu0
        %v1977 = vadd.f32 %v1460, %v1976
        %v1978 = vpop.f32.mrf.mxu0
        %v1979 = vpop.f32.mrf.mxu0
        %v1980 = vadd.f32 %v1465, %v1979
        %v1981 = vpop.f32.mrf.mxu0
        %1982 = vmatprep.mubr.bf16.mxu0 %v1751
        %1983 = vmatmul.mubr.bf16.gmra.mxu0 %v1750
        %v1984 = vpop.f32.mrf.mxu0
        %v1985 = vadd.f32 %v1470, %v1984
        %v1986 = vpop.f32.mrf.mxu0
        %v1987 = vpop.f32.mrf.mxu0
        %v1988 = vadd.f32 %v1475, %v1987
        %v1989 = vpop.f32.mrf.mxu0
        %1990 = vmatprep.mubr.bf16.mxu0 %v1754
        %1991 = vmatmul.mubr.bf16.gmra.mxu0 %v1753
        %v1992 = vpop.f32.mrf.mxu0
        %v1993 = vadd.f32 %v1480, %v1992
        %v1994 = vpop.f32.mrf.mxu0
        %v1995 = vpop.f32.mrf.mxu0
        %v1996 = vadd.f32 %v1485, %v1995
        %v1997 = vpop.f32.mrf.mxu0
        %1998 = vmatprep.mubr.bf16.mxu0 %v1757
        %1999 = vmatmul.mubr.bf16.gmra.mxu0 %v1756
        %v2000 = vpop.f32.mrf.mxu0
        %v2001 = vadd.f32 %v1490, %v2000
        %v2002 = vpop.f32.mrf.mxu0
        %v2003 = vpop.f32.mrf.mxu0
        %v2004 = vadd.f32 %v1495, %v2003
        %v2005 = vpop.f32.mrf.mxu0
        %2006 = vmatprep.mubr.bf16.mxu0 %v1760
        %2007 = vmatmul.mubr.bf16.gmra.mxu0 %v1759
        %v2008 = vpop.f32.mrf.mxu0
        %v2009 = vadd.f32 %v1500, %v2008
        %v2010 = vpop.f32.mrf.mxu0
        %v2011 = vpop.f32.mrf.mxu0
        %v2012 = vadd.f32 %v1505, %v2011
        %v2013 = vpop.f32.mrf.mxu0
        %2014 = vmatprep.mubr.bf16.mxu0 %v1763
        %2015 = vmatmul.mubr.bf16.gmra.mxu0 %v1762
        %v2016 = vpop.f32.mrf.mxu0
        %v2017 = vadd.f32 %v1510, %v2016
        %v2018 = vpop.f32.mrf.mxu0
        %v2019 = vpop.f32.mrf.mxu0
        %v2020 = vadd.f32 %v1515, %v2019
        %v2021 = vpop.f32.mrf.mxu0
        %2022 = vmatprep.mubr.bf16.mxu0 %v1766
        %2023 = vmatmul.mubr.bf16.gmra.mxu0 %v1765
        %v2024 = vpop.f32.mrf.mxu0
        %v2025 = vadd.f32 %v1520, %v2024
        %v2026 = vpop.f32.mrf.mxu0
        %v2027 = vpop.f32.mrf.mxu0
        %v2028 = vadd.f32 %v1525, %v2027
        %v2029 = vpop.f32.mrf.mxu0
        %2030 = vmatprep.mubr.bf16.mxu0 %v1769
        %2031 = vmatmul.mubr.bf16.gmra.mxu0 %v1768
        %v2032 = vpop.f32.mrf.mxu0
        %v2033 = vadd.f32 %v1530, %v2032
        %v2034 = vpop.f32.mrf.mxu0
        %v2035 = vpop.f32.mrf.mxu0
        %v2036 = vadd.f32 %v1535, %v2035
        %v2037 = vpop.f32.mrf.mxu0
        %2038 = vdwg.mxu0
        %2039 = vmatprep.subr.bf16.mxu0 0
        %2040 = vmatpush1.bf16.msra.mxu0 0
        %2041 = vmatprep.subr.bf16.mxu0 0
        %2042 = vmatpush1.bf16.msra.mxu0 0
        %2043 = vmatprep.subr.bf16.mxu0 0
        %2044 = vmatpush1.bf16.msra.mxu0 0
        %2045 = vmatprep.subr.bf16.mxu0 0
        %2046 = vmatpush1.bf16.msra.mxu0 0
        %2047 = vmatprep.subr.bf16.mxu0 0
        %2048 = vmatpush1.bf16.msra.mxu0 0
        %2049 = vmatprep.subr.bf16.mxu0 0
        %2050 = vmatpush1.bf16.msra.mxu0 0
        %2051 = vmatprep.subr.bf16.mxu0 0
        %2052 = vmatpush1.bf16.msra.mxu0 %v1248
        %2053 = vmatprep.subr.bf16.mxu0 0
        %2054 = vmatpush1.bf16.msra.mxu0 %v1247
        %2055 = vmatprep.subr.bf16.mxu0 0
        %2056 = vmatpush2.bf16.msra.mxu0 0
        %2057 = vmatprep.subr.bf16.mxu0 0
        %2058 = vmatpush2.bf16.msra.mxu0 0
        %2059 = vmatprep.subr.bf16.mxu0 0
        %2060 = vmatpush2.bf16.msra.mxu0 0
        %2061 = vmatprep.subr.bf16.mxu0 0
        %2062 = vmatpush2.bf16.msra.mxu0 0
        %2063 = vmatprep.subr.bf16.mxu0 0
        %2064 = vmatpush2.bf16.msra.mxu0 0
        %2065 = vmatprep.subr.bf16.mxu0 0
        %2066 = vmatpush2.bf16.msra.mxu0 0
        %2067 = vmatprep.subr.bf16.mxu0 0
        %2068 = vmatpush2.bf16.msra.mxu0 0
        %2069 = vmatprep.subr.bf16.mxu0 0
        %2070 = vmatpush2.bf16.msra.mxu0 0
        %2071 = vmatprep.mubr.bf16.mxu0 0
        %2072 = vmatmul.mubr.bf16.gmra.mxu0 %v1809
        %v2073 = vpop.f32.mrf.mxu0
        %v2074 = vadd.f32 %v1897, %v2073
        %v2075 = vpop.f32.mrf.mxu0
        %v2076 = vpop.f32.mrf.mxu0
        %v2077 = vadd.f32 %v1900, %v2076
        %v2078 = vpop.f32.mrf.mxu0
        %2079 = vmatprep.mubr.bf16.mxu0 0
        %2080 = vmatmul.mubr.bf16.gmra.mxu0 %v1812
        %v2081 = vpop.f32.mrf.mxu0
        %v2082 = vadd.f32 %v1905, %v2081
        %v2083 = vpop.f32.mrf.mxu0
        %v2084 = vpop.f32.mrf.mxu0
        %v2085 = vadd.f32 %v1908, %v2084
        %v2086 = vpop.f32.mrf.mxu0
        %2087 = vmatprep.mubr.bf16.mxu0 0
        %2088 = vmatmul.mubr.bf16.gmra.mxu0 %v1815
        %v2089 = vpop.f32.mrf.mxu0
        %v2090 = vadd.f32 %v1913, %v2089
        %v2091 = vpop.f32.mrf.mxu0
        %v2092 = vpop.f32.mrf.mxu0
        %v2093 = vadd.f32 %v1916, %v2092
        %v2094 = vpop.f32.mrf.mxu0
        %2095 = vmatprep.mubr.bf16.mxu0 0
        %2096 = vmatmul.mubr.bf16.gmra.mxu0 %v1818
        %v2097 = vpop.f32.mrf.mxu0
        %v2098 = vadd.f32 %v1921, %v2097
        %v2099 = vpop.f32.mrf.mxu0
        %v2100 = vpop.f32.mrf.mxu0
        %v2101 = vadd.f32 %v1924, %v2100
        %v2102 = vpop.f32.mrf.mxu0
        %2103 = vmatprep.mubr.bf16.mxu0 0
        %2104 = vmatmul.mubr.bf16.gmra.mxu0 %v1821
        %v2105 = vpop.f32.mrf.mxu0
        %v2106 = vadd.f32 %v1929, %v2105
        %v2107 = vpop.f32.mrf.mxu0
        %v2108 = vpop.f32.mrf.mxu0
        %v2109 = vadd.f32 %v1932, %v2108
        %v2110 = vpop.f32.mrf.mxu0
        %2111 = vmatprep.mubr.bf16.mxu0 0
        %2112 = vmatmul.mubr.bf16.gmra.mxu0 %v1824
        %v2113 = vpop.f32.mrf.mxu0
        %v2114 = vadd.f32 %v1937, %v2113
        %v2115 = vpop.f32.mrf.mxu0
        %v2116 = vpop.f32.mrf.mxu0
        %v2117 = vadd.f32 %v1940, %v2116
        %v2118 = vpop.f32.mrf.mxu0
        %2119 = vmatprep.mubr.bf16.mxu0 0
        %2120 = vmatmul.mubr.bf16.gmra.mxu0 %v1827
        %v2121 = vpop.f32.mrf.mxu0
        %v2122 = vadd.f32 %v1945, %v2121
        %v2123 = vpop.f32.mrf.mxu0
        %v2124 = vpop.f32.mrf.mxu0
        %v2125 = vadd.f32 %v1948, %v2124
        %v2126 = vpop.f32.mrf.mxu0
        %2127 = vmatprep.mubr.bf16.mxu0 0
        %2128 = vmatmul.mubr.bf16.gmra.mxu0 %v1830
        %v2129 = vpop.f32.mrf.mxu0
        %v2130 = vadd.f32 %v1953, %v2129
        %v2131 = vpop.f32.mrf.mxu0
        %v2132 = vpop.f32.mrf.mxu0
        %v2133 = vadd.f32 %v1956, %v2132
        %v2134 = vpop.f32.mrf.mxu0
        %2135 = vmatprep.mubr.bf16.mxu0 0
        %2136 = vmatmul.mubr.bf16.gmra.mxu0 %v1833
        %v2137 = vpop.f32.mrf.mxu0
        %v2138 = vadd.f32 %v1961, %v2137
        %v2139 = vpop.f32.mrf.mxu0
        %v2140 = vpop.f32.mrf.mxu0
        %v2141 = vadd.f32 %v1964, %v2140
        %v2142 = vpop.f32.mrf.mxu0
        %2143 = vmatprep.mubr.bf16.mxu0 0
        %2144 = vmatmul.mubr.bf16.gmra.mxu0 %v1836
        %v2145 = vpop.f32.mrf.mxu0
        %v2146 = vadd.f32 %v1969, %v2145
        %v2147 = vpop.f32.mrf.mxu0
        %v2148 = vpop.f32.mrf.mxu0
        %v2149 = vadd.f32 %v1972, %v2148
        %v2150 = vpop.f32.mrf.mxu0
        %2151 = vmatprep.mubr.bf16.mxu0 0
        %2152 = vmatmul.mubr.bf16.gmra.mxu0 %v1839
        %v2153 = vpop.f32.mrf.mxu0
        %v2154 = vadd.f32 %v1977, %v2153
        %v2155 = vpop.f32.mrf.mxu0
        %v2156 = vpop.f32.mrf.mxu0
        %v2157 = vadd.f32 %v1980, %v2156
        %v2158 = vpop.f32.mrf.mxu0
        %2159 = vmatprep.mubr.bf16.mxu0 0
        %2160 = vmatmul.mubr.bf16.gmra.mxu0 %v1842
        %v2161 = vpop.f32.mrf.mxu0
        %v2162 = vadd.f32 %v1985, %v2161
        %v2163 = vpop.f32.mrf.mxu0
        %v2164 = vpop.f32.mrf.mxu0
        %v2165 = vadd.f32 %v1988, %v2164
        %v2166 = vpop.f32.mrf.mxu0
        %2167 = vmatprep.mubr.bf16.mxu0 0
        %2168 = vmatmul.mubr.bf16.gmra.mxu0 %v1845
        %v2169 = vpop.f32.mrf.mxu0
        %v2170 = vadd.f32 %v1993, %v2169
        %v2171 = vpop.f32.mrf.mxu0
        %v2172 = vpop.f32.mrf.mxu0
        %v2173 = vadd.f32 %v1996, %v2172
        %v2174 = vpop.f32.mrf.mxu0
        %2175 = vmatprep.mubr.bf16.mxu0 0
        %2176 = vmatmul.mubr.bf16.gmra.mxu0 %v1848
        %v2177 = vpop.f32.mrf.mxu0
        %v2178 = vadd.f32 %v2001, %v2177
        %v2179 = vpop.f32.mrf.mxu0
        %v2180 = vpop.f32.mrf.mxu0
        %v2181 = vadd.f32 %v2004, %v2180
        %v2182 = vpop.f32.mrf.mxu0
        %2183 = vmatprep.mubr.bf16.mxu0 0
        %2184 = vmatmul.mubr.bf16.gmra.mxu0 %v1851
        %v2185 = vpop.f32.mrf.mxu0
        %v2186 = vadd.f32 %v2009, %v2185
        %v2187 = vpop.f32.mrf.mxu0
        %v2188 = vpop.f32.mrf.mxu0
        %v2189 = vadd.f32 %v2012, %v2188
        %v2190 = vpop.f32.mrf.mxu0
        %2191 = vmatprep.mubr.bf16.mxu0 0
        %2192 = vmatmul.mubr.bf16.gmra.mxu0 %v1854
        %v2193 = vpop.f32.mrf.mxu0
        %v2194 = vadd.f32 %v2017, %v2193
        %v2195 = vpop.f32.mrf.mxu0
        %v2196 = vpop.f32.mrf.mxu0
        %v2197 = vadd.f32 %v2020, %v2196
        %v2198 = vpop.f32.mrf.mxu0
        %2199 = vmatprep.mubr.bf16.mxu0 0
        %2200 = vmatmul.mubr.bf16.gmra.mxu0 %v1857
        %v2201 = vpop.f32.mrf.mxu0
        %v2202 = vadd.f32 %v2025, %v2201
        %v2203 = vpop.f32.mrf.mxu0
        %v2204 = vpop.f32.mrf.mxu0
        %v2205 = vadd.f32 %v2028, %v2204
        %v2206 = vpop.f32.mrf.mxu0
        %2207 = vmatprep.mubr.bf16.mxu0 0
        %2208 = vmatmul.mubr.bf16.gmra.mxu0 %v1860
        %v2209 = vpop.f32.mrf.mxu0
        %v2210 = vadd.f32 %v2033, %v2209
        %v2211 = vpop.f32.mrf.mxu0
        %v2212 = vpop.f32.mrf.mxu0
        %v2213 = vadd.f32 %v2036, %v2212
        %v2214 = vpop.f32.mrf.mxu0
        %2215 = vdwg.mxu0
        %2216 = vst [vmem:[%s237] sm:$0xff] %v2074
        %2217 = vst [vmem:[%s237 + $0x8] sm:$0xff] %v2077
        %2218 = vst [vmem:[%s237 + $0x10] sm:$0xff] %v2082
        %2219 = vst [vmem:[%s237 + $0x18] sm:$0xff] %v2085
        %2220 = vst [vmem:[%s237 + $0x20] sm:$0xff] %v2090
        %2221 = vst [vmem:[%s237 + $0x28] sm:$0xff] %v2093
        %2222 = vst [vmem:[%s237 + $0x30] sm:$0xff] %v2098
        %2223 = vst [vmem:[%s237 + $0x38] sm:$0xff] %v2101
        %2224 = vst [vmem:[%s237 + $0x40] sm:$0xff] %v2106
        %2225 = vst [vmem:[%s237 + $0x48] sm:$0xff] %v2109
        %2226 = vst [vmem:[%s237 + $0x50] sm:$0xff] %v2114
        %2227 = vst [vmem:[%s237 + $0x58] sm:$0xff] %v2117
        %2228 = vst [vmem:[%s237 + $0x60] sm:$0xff] %v2122
        %2229 = vst [vmem:[%s237 + $0x68] sm:$0xff] %v2125
        %2230 = vst [vmem:[%s237 + $0x70] sm:$0xff] %v2130
        %2231 = vst [vmem:[%s237 + $0x78] sm:$0xff] %v2133
        %2232 = vst [vmem:[%s237 + $0x80] sm:$0xff] %v2138
        %2233 = vst [vmem:[%s237 + $0x88] sm:$0xff] %v2141
        %2234 = vst [vmem:[%s237 + $0x90] sm:$0xff] %v2146
        %2235 = vst [vmem:[%s237 + $0x98] sm:$0xff] %v2149
        %2236 = vst [vmem:[%s237 + $0xa0] sm:$0xff] %v2154
        %2237 = vst [vmem:[%s237 + $0xa8] sm:$0xff] %v2157
        %2238 = vst [vmem:[%s237 + $0xb0] sm:$0xff] %v2162
        %2239 = vst [vmem:[%s237 + $0xb8] sm:$0xff] %v2165
        %2240 = vst [vmem:[%s237 + $0xc0] sm:$0xff] %v2170
        %2241 = vst [vmem:[%s237 + $0xc8] sm:$0xff] %v2173
        %2242 = vst [vmem:[%s237 + $0xd0] sm:$0xff] %v2178
        %2243 = vst [vmem:[%s237 + $0xd8] sm:$0xff] %v2181
        %2244 = vst [vmem:[%s237 + $0xe0] sm:$0xff] %v2186
        %2245 = vst [vmem:[%s237 + $0xe8] sm:$0xff] %v2189
        %2246 = vst [vmem:[%s237 + $0xf0] sm:$0xff] %v2194
        %2247 = vst [vmem:[%s237 + $0xf8] sm:$0xff] %v2197
        %2248 = vst [vmem:[%s237 + $0x100] sm:$0xff] %v2202
        %2249 = vst [vmem:[%s237 + $0x108] sm:$0xff] %v2205
        %2250 = vst [vmem:[%s237 + $0x110] sm:$0xff] %v2210
        %2251 = vst [vmem:[%s237 + $0x118] sm:$0xff] %v2213
        %s2252 = sand.u32 %s153, 1
        %s2253 = scalar_lea.sflag [#allocation3], %s2252
        %s2254 = sand.u32 %s153, 1
        %s2255 = smul.addr %s2254, 288
        %s2256 = scalar_lea.vmem [#allocation2], %s2255
        // Predicated region
        $region41: #{position_embedding_learned.1} parent=39 // pred_check
          %p2257 = pneg %p163
        $region42: #{position_embedding_learned.1} parent=39 // pred_check_branch
          %2259 = sbr.rel (%p2257) target = $region44
        $region43: #{position_embedding_learned.1} parent=39 // pred_region
          %s2261 = ssub.s32 4608, 4608
          %2262 = vsyncadd %s2253, %s2261
          %s2263 = smul.addr %s23, 36
          %s2264 = sadd.s32 %s24, %s2263
          %s2265 = smul.addr %s2264, 128
          %s2266 = scalar_lea.hbm %s5, %s2265
          %s2267 = sshll.u32 %s2256, 4
          %s2268 = int_to_ptr.vmem [resolvable:$true] %s2267
          %2273 = dma.vmem_to_hbm [thread:$0]  %s2268, 4608, %s2266, %s2253, 128, 128, 8
        $region44: #{position_embedding_learned.1} parent=39 // pred_fallthru
          _
      $region40: #{position_embedding_learned.1} parent=5 // pred_fallthru
        _
      %p2274 = scmp.le.s32.totalorder 2, %s14
      // Predicated region
      $region45: #{position_embedding_learned.1} parent=5 // pred_check
        %p2275 = pneg %p2274
      $region46: #{position_embedding_learned.1} parent=5 // pred_check_branch
        %2277 = sbr.rel (%p2275) target = $region48
      $region47: #{position_embedding_learned.1} parent=5 // pred_region
        %s2278 = ssub.s32 %s14, 2
        // Predicated region
        $region49: #{position_embedding_learned.1} parent=47 // pred_check
          %p2279 = pneg %p169
        $region50: #{position_embedding_learned.1} parent=47 // pred_check_branch
          %2281 = sbr.rel (%p2279) target = $region52
        $region51: #{position_embedding_learned.1} parent=47 // pred_region
          %s2282 = sand.u32 %s154, 1
          %s2283 = scalar_lea.sflag [#allocation3], %s2282
          %s2284 = sand.u32 %s154, 1
          %s2285 = smul.addr %s2284, 288
          %s2286 = scalar_lea.vmem [#allocation2], %s2285
          %2287 = dma.done %s2283, 4608
        $region52: #{position_embedding_learned.1} parent=47 // pred_fallthru
          _
      $region48: #{position_embedding_learned.1} parent=5 // pred_fallthru
        _
    $region6: #{position_embedding_learned.1} parent=1 // loop_footer
      %s18 = sadd.s32 1, %s14
    $region7: #{position_embedding_learned.1} parent=1 // loop_footer_branch
      %13 = sbr.rel target = $region3
    $region8: #{position_embedding_learned.1} parent=1 // loop_exit
      _
    %2288 = vsyncpa [#allocation3], 1
    %s2289 = scalar_lea.sflag [#allocation3], 1
    %2290 = vsyncpa %s2289, 1

</llo_original>
